<compile_context>
chip_gen: v7x
topology: tpu7x:2x2x1
jax: 0.10.0
libtpu: 0.0.40
codegen_flags: <defaults>
</compile_context>

<pallas_src>
import jax
import jax.numpy as jnp
from jax.experimental import pallas as pl
from jax.experimental.pallas import tpu as pltpu


# ---------------------------------------------------------------------------
# Fused stacked-LSTM Pallas kernel (all layers, all timesteps, one grid point)
# ---------------------------------------------------------------------------
def _make_encoder_lstm_kernel(seq_len, batch, hidden, num_layers, mxu_dtype):

    def kernel(x_ref, *refs):
        # refs layout: [w_ih_0, w_hh_0, b_0, ..., w_ih_{L-1}, w_hh_{L-1}, b_{L-1},
        #               out_ref, hN_ref, cN_ref, gates_scratch]
        w_refs = refs[:3 * num_layers]
        out_ref = refs[3 * num_layers + 0]      # (seq*batch, hidden) f32
        hN_ref = refs[3 * num_layers + 1]       # (num_layers, batch, hidden)
        cN_ref = refs[3 * num_layers + 2]       # (num_layers, batch, hidden)
        gates_ref = refs[3 * num_layers + 3]    # VMEM scratch (seq*batch, 4H)

        for layer in range(num_layers):
            w_ih = w_refs[3 * layer + 0][...]   # (in_dim, 4H)  mxu_dtype
            w_hh = w_refs[3 * layer + 1][...]   # (hidden, 4H)  mxu_dtype
            b = w_refs[3 * layer + 2][...]      # (1, 4H)       f32

            # Layer input: embedded tokens for layer 0, otherwise the previous
            # layer's outputs, which are already VMEM-resident in out_ref.
            if layer == 0:
                x_in = x_ref[...]
            else:
                x_in = out_ref[...].astype(mxu_dtype)

            # Hoisted input projection for ALL timesteps at once (one big,
            # MXU-friendly matmul instead of seq_len tiny ones on the serial
            # critical path).  Bias folded in here too.
            gates_ref[...] = (
                jnp.dot(x_in, w_ih, preferred_element_type=jnp.float32) + b)

            h = jnp.zeros((batch, hidden), jnp.float32)
            c = jnp.zeros((batch, hidden), jnp.float32)

            # Fully-unrolled recurrence: only h @ W_hh remains per step.
            for t in range(seq_len):
                row = t * batch
                g = (gates_ref[pl.ds(row, batch), :]
                     + jnp.dot(h.astype(mxu_dtype), w_hh,
                               preferred_element_type=jnp.float32))
                # Full-vreg activations, then cheap slices (gate order i,f,g,o).
                sig = jax.nn.sigmoid(g)
                tnh = jnp.tanh(g)
                i_g = sig[:, 0 * hidden:1 * hidden]
                f_g = sig[:, 1 * hidden:2 * hidden]
                g_g = tnh[:, 2 * hidden:3 * hidden]
                o_g = sig[:, 3 * hidden:4 * hidden]
                c = f_g * c + i_g * g_g
                h = o_g * jnp.tanh(c)
                out_ref[pl.ds(row, batch), :] = h

            hN_ref[layer] = h
            cN_ref[layer] = c

    return kernel


def encoder_lstm_pallas(x2d, lstm_params, seq_len, batch,
                        mxu_dtype=jnp.float32):
    """Fused stacked LSTM.

    x2d:  (seq_len*batch, embed_dim), already cast to mxu_dtype.
    lstm_params: list of {'w_ih_t': (in,4H), 'w_hh_t': (H,4H), 'b': (1,4H)}.
    Returns outputs2d (seq*batch, H), h_n (L,B,H), c_n (L,B,H).
    """
    num_layers = len(lstm_params)
    hidden = lstm_params[0]["w_hh_t"].shape[0]

    w_args = []
    for layer in lstm_params:
        w_args += [layer["w_ih_t"].astype(mxu_dtype),
                   layer["w_hh_t"].astype(mxu_dtype),
                   layer["b"].astype(jnp.float32)]

    kernel = _make_encoder_lstm_kernel(seq_len, batch, hidden, num_layers,
                                       mxu_dtype)

    # No grid: every input/output is a whole-array VMEM-resident block and the
    # outputs are written back to HBM once as dense blocks.
    # TODO(synk): for large batch on v7x, add a leading "parallel" grid axis
    # over batch halves to use both TensorCores (time axis must stay serial).
    return pl.pallas_call(
        kernel,
        out_shape=(
            jax.ShapeDtypeStruct((seq_len * batch, hidden), jnp.float32),
            jax.ShapeDtypeStruct((num_layers, batch, hidden), jnp.float32),
            jax.ShapeDtypeStruct((num_layers, batch, hidden), jnp.float32),
        ),
        scratch_shapes=[
            pltpu.VMEM((seq_len * batch, 4 * hidden), jnp.float32),
        ],
    )(x2d, *w_args)


# ---------------------------------------------------------------------------
# Encoder forward: embedding gather (plain-JAX glue) + fused LSTM kernel.
# ---------------------------------------------------------------------------
def encoder_forward(params, src, mxu_dtype=jnp.float32):
    # Embedding lookup kept in plain JAX; dropout = identity (eval semantics).
    # TODO(synk): embedding gather could be fused via scalar-prefetched token
    # ids + per-row DMA gather, but is left as XLA glue here.
    embedded = params["embedding"][src]                 # (seq, batch, embed)
    seq_len, batch, embed_dim = embedded.shape
    hidden = params["lstm"][0]["w_hh_t"].shape[0]

    x2d = embedded.reshape(seq_len * batch, embed_dim).astype(mxu_dtype)
    out2d, h_n, c_n = encoder_lstm_pallas(
        x2d, params["lstm"], seq_len, batch, mxu_dtype=mxu_dtype)

    outputs = out2d.reshape(seq_len, batch, hidden)
    return outputs, h_n, c_n


# ---------------------------------------------------------------------------
# Deterministic parameter init (shapes follow nn.Embedding / nn.LSTM).
# ---------------------------------------------------------------------------
def init_params(key, input_dim, embed_dim, hidden_dim, num_layers):
    keys = jax.random.split(key, 1 + 4 * num_layers)
    params = {"embedding": jax.random.normal(
        keys[0], (input_dim, embed_dim), jnp.float32) * 0.1}
    lstm = []
    k = 1
    scale = 1.0 / jnp.sqrt(hidden_dim)
    for layer in range(num_layers):
        in_dim = embed_dim if layer == 0 else hidden_dim
        w_ih = jax.random.uniform(keys[k + 0], (4 * hidden_dim, in_dim),
                                  jnp.float32, -scale, scale)
        w_hh = jax.random.uniform(keys[k + 1], (4 * hidden_dim, hidden_dim),
                                  jnp.float32, -scale, scale)
        b_ih = jax.random.uniform(keys[k + 2], (4 * hidden_dim,),
                                  jnp.float32, -scale, scale)
        b_hh = jax.random.uniform(keys[k + 3], (4 * hidden_dim,),
                                  jnp.float32, -scale, scale)
        k += 4
        lstm.append({
            "w_ih_t": w_ih.T,                       # (in_dim, 4H)
            "w_hh_t": w_hh.T,                       # (H, 4H)
            "b": (b_ih + b_hh)[None, :],            # (1, 4H)
        })
    params["lstm"] = lstm
    return params


# ---------------------------------------------------------------------------
# Pure-JAX reference (sanity check).
# ---------------------------------------------------------------------------
def _lstm_layer_ref(x, w_ih_t, w_hh_t, b):
    hidden = w_hh_t.shape[0]
    batch = x.shape[1]

    def step(carry, x_t):
        h, c = carry
        gates = x_t @ w_ih_t + h @ w_hh_t + b
        i = jax.nn.sigmoid(gates[:, 0 * hidden:1 * hidden])
        f = jax.nn.sigmoid(gates[:, 1 * hidden:2 * hidden])
        g = jnp.tanh(gates[:, 2 * hidden:3 * hidden])
        o = jax.nn.sigmoid(gates[:, 3 * hidden:4 * hidden])
        c_new = f * c + i * g
        h_new = o * jnp.tanh(c_new)
        return (h_new, c_new), h_new

    init = (jnp.zeros((batch, hidden), jnp.float32),
            jnp.zeros((batch, hidden), jnp.float32))
    (h_n, c_n), outs = jax.lax.scan(step, init, x)
    return outs, h_n, c_n


def encoder_ref(params, src):
    x = params["embedding"][src].astype(jnp.float32)
    h_list, c_list = [], []
    for layer in params["lstm"]:
        outs, h_n, c_n = _lstm_layer_ref(
            x, layer["w_ih_t"], layer["w_hh_t"], layer["b"])
        h_list.append(h_n)
        c_list.append(c_n)
        x = outs
    return outs, jnp.stack(h_list), jnp.stack(c_list)


if __name__ == "__main__":
    # Small shapes consistent with the module.
    input_dim, embed_dim, hidden_dim, num_layers = 20, 16, 32, 2
    seq_len, batch = 8, 8

    key = jax.random.PRNGKey(0)
    pkey, skey = jax.random.split(key)
    params = init_params(pkey, input_dim, embed_dim, hidden_dim, num_layers)
    src = jax.random.randint(skey, (seq_len, batch), 0, input_dim, jnp.int32)

    outputs, hidden, cell = encoder_forward(params, src)
    jax.block_until_ready((outputs, hidden, cell))

    # Sanity check against the pure-JAX reference.
    outputs_r, hidden_r, cell_r = encoder_ref(params, src)
    assert outputs.shape == (seq_len, batch, hidden_dim)
    assert hidden.shape == (num_layers, batch, hidden_dim)
    assert cell.shape == (num_layers, batch, hidden_dim)
    for a, b in ((outputs, outputs_r), (hidden, hidden_r), (cell, cell_r)):
        assert jnp.allclose(a, b, rtol=2e-3, atol=2e-3)

    print("KERNEL_OK")
</pallas_src>

<mosaic_0001>
module attributes {stable_mosaic.version = 11 : i64} {
  func.func @kernel(%arg0: memref<64x16xf32, #tpu.memory_space<vmem>>, %arg1: memref<16x128xf32, #tpu.memory_space<vmem>>, %arg2: memref<32x128xf32, #tpu.memory_space<vmem>>, %arg3: memref<1x128xf32, #tpu.memory_space<vmem>>, %arg4: memref<32x128xf32, #tpu.memory_space<vmem>>, %arg5: memref<32x128xf32, #tpu.memory_space<vmem>>, %arg6: memref<1x128xf32, #tpu.memory_space<vmem>>, %arg7: memref<64x32xf32, #tpu.memory_space<vmem>>, %arg8: memref<2x8x32xf32, #tpu.memory_space<vmem>>, %arg9: memref<2x8x32xf32, #tpu.memory_space<vmem>>, %arg10: memref<64x128xf32, #tpu.memory_space<vmem>>) attributes {dimension_semantics = [], scalar_prefetch = 0 : i64, scratch_operands = 1 : i64, tpu.core_type = #tpu.core_type<tc>} {
    %c0 = arith.constant 0 : index
    %c0_0 = arith.constant 0 : index
    %0 = vector.load %arg1[%c0, %c0_0] : memref<16x128xf32, #tpu.memory_space<vmem>>, vector<16x128xf32>
    %c0_1 = arith.constant 0 : index
    %c0_2 = arith.constant 0 : index
    %1 = vector.load %arg2[%c0_1, %c0_2] : memref<32x128xf32, #tpu.memory_space<vmem>>, vector<32x128xf32>
    %c0_3 = arith.constant 0 : index
    %c0_4 = arith.constant 0 : index
    %2 = vector.load %arg3[%c0_3, %c0_4] : memref<1x128xf32, #tpu.memory_space<vmem>>, vector<1x128xf32>
    %c0_5 = arith.constant 0 : index
    %c0_6 = arith.constant 0 : index
    %3 = vector.load %arg0[%c0_5, %c0_6] : memref<64x16xf32, #tpu.memory_space<vmem>>, vector<64x16xf32>
    %cst = arith.constant dense<0.000000e+00> : vector<64x128xf32>
    %4 = tpu.matmul %3, %0, %cst {dimension_numbers = #tpu.dot_dimension_numbers<[1], [0], [0], [1], [0, 0, 1, 1], [], []>} : vector<64x16xf32>, vector<16x128xf32>, vector<64x128xf32> -> vector<64x128xf32>
    %5 = vector.broadcast %2 : vector<1x128xf32> to vector<64x128xf32>
    %6 = arith.addf %4, %5 : vector<64x128xf32>
    %c0_7 = arith.constant 0 : index
    %c0_8 = arith.constant 0 : index
    %7 = vector.load %arg10[%c0_7, %c0_8] : memref<64x128xf32, #tpu.memory_space<vmem>>, vector<64x128xf32>
    tpu.vector_store %arg10[%c0_7, %c0_8], %6 {strides = array<i32>} : memref<64x128xf32, #tpu.memory_space<vmem>>, vector<64x128xf32>,
    %cst_9 = arith.constant 0.000000e+00 : f32
    %8 = vector.broadcast %cst_9 : f32 to vector<8x32xf32>
    %cst_10 = arith.constant 0.000000e+00 : f32
    %9 = vector.broadcast %cst_10 : f32 to vector<8x32xf32>
    %c0_11 = arith.constant 0 : index
    %c0_12 = arith.constant 0 : index
    %10 = vector.load %arg10[%c0_11, %c0_12] : memref<64x128xf32, #tpu.memory_space<vmem>>, vector<8x128xf32>
    %cst_13 = arith.constant dense<0.000000e+00> : vector<8x128xf32>
    %11 = tpu.matmul %8, %1, %cst_13 {dimension_numbers = #tpu.dot_dimension_numbers<[1], [0], [0], [1], [0, 0, 1, 1], [], []>} : vector<8x32xf32>, vector<32x128xf32>, vector<8x128xf32> -> vector<8x128xf32>
    %12 = arith.addf %10, %11 : vector<8x128xf32>
    %13 = arith.negf %12 : vector<8x128xf32>
    %14 = math.exp %13 : vector<8x128xf32>
    %cst_14 = arith.constant 1.000000e+00 : f32
    %15 = vector.broadcast %cst_14 : f32 to vector<8x128xf32>
    %16 = arith.addf %15, %14 : vector<8x128xf32>
    %17 = arith.divf %15, %16 : vector<8x128xf32>
    %18 = math.tanh %12 : vector<8x128xf32>
    %19 = vector.extract_strided_slice %17 {offsets = [0, 0], sizes = [8, 32], strides = [1, 1]} : vector<8x128xf32> to vector<8x32xf32>
    %20 = vector.extract_strided_slice %17 {offsets = [0, 32], sizes = [8, 32], strides = [1, 1]} : vector<8x128xf32> to vector<8x32xf32>
    %21 = vector.extract_strided_slice %18 {offsets = [0, 64], sizes = [8, 32], strides = [1, 1]} : vector<8x128xf32> to vector<8x32xf32>
    %22 = vector.extract_strided_slice %17 {offsets = [0, 96], sizes = [8, 32], strides = [1, 1]} : vector<8x128xf32> to vector<8x32xf32>
    %23 = arith.mulf %20, %9 : vector<8x32xf32>
    %24 = arith.mulf %19, %21 : vector<8x32xf32>
    %25 = arith.addf %23, %24 : vector<8x32xf32>
    %26 = math.tanh %25 : vector<8x32xf32>
    %27 = arith.mulf %22, %26 : vector<8x32xf32>
    %c0_15 = arith.constant 0 : index
    %c0_16 = arith.constant 0 : index
    %28 = vector.load %arg7[%c0_15, %c0_16] : memref<64x32xf32, #tpu.memory_space<vmem>>, vector<8x32xf32>
    tpu.vector_store %arg7[%c0_15, %c0_16], %27 {strides = array<i32>} : memref<64x32xf32, #tpu.memory_space<vmem>>, vector<8x32xf32>,
    %c8 = arith.constant 8 : index
    %c0_17 = arith.constant 0 : index
    %29 = vector.load %arg10[%c8, %c0_17] : memref<64x128xf32, #tpu.memory_space<vmem>>, vector<8x128xf32>
    %cst_18 = arith.constant dense<0.000000e+00> : vector<8x128xf32>
    %30 = tpu.matmul %27, %1, %cst_18 {dimension_numbers = #tpu.dot_dimension_numbers<[1], [0], [0], [1], [0, 0, 1, 1], [], []>} : vector<8x32xf32>, vector<32x128xf32>, vector<8x128xf32> -> vector<8x128xf32>
    %31 = arith.addf %29, %30 : vector<8x128xf32>
    %32 = arith.negf %31 : vector<8x128xf32>
    %33 = math.exp %32 : vector<8x128xf32>
    %cst_19 = arith.constant 1.000000e+00 : f32
    %34 = vector.broadcast %cst_19 : f32 to vector<8x128xf32>
    %35 = arith.addf %34, %33 : vector<8x128xf32>
    %36 = arith.divf %34, %35 : vector<8x128xf32>
    %37 = math.tanh %31 : vector<8x128xf32>
    %38 = vector.extract_strided_slice %36 {offsets = [0, 0], sizes = [8, 32], strides = [1, 1]} : vector<8x128xf32> to vector<8x32xf32>
    %39 = vector.extract_strided_slice %36 {offsets = [0, 32], sizes = [8, 32], strides = [1, 1]} : vector<8x128xf32> to vector<8x32xf32>
    %40 = vector.extract_strided_slice %37 {offsets = [0, 64], sizes = [8, 32], strides = [1, 1]} : vector<8x128xf32> to vector<8x32xf32>
    %41 = vector.extract_strided_slice %36 {offsets = [0, 96], sizes = [8, 32], strides = [1, 1]} : vector<8x128xf32> to vector<8x32xf32>
    %42 = arith.mulf %39, %25 : vector<8x32xf32>
    %43 = arith.mulf %38, %40 : vector<8x32xf32>
    %44 = arith.addf %42, %43 : vector<8x32xf32>
    %45 = math.tanh %44 : vector<8x32xf32>
    %46 = arith.mulf %41, %45 : vector<8x32xf32>
    %c8_20 = arith.constant 8 : index
    %c0_21 = arith.constant 0 : index
    %47 = vector.load %arg7[%c8_20, %c0_21] : memref<64x32xf32, #tpu.memory_space<vmem>>, vector<8x32xf32>
    tpu.vector_store %arg7[%c8_20, %c0_21], %46 {strides = array<i32>} : memref<64x32xf32, #tpu.memory_space<vmem>>, vector<8x32xf32>,
    %c16 = arith.constant 16 : index
    %c0_22 = arith.constant 0 : index
    %48 = vector.load %arg10[%c16, %c0_22] : memref<64x128xf32, #tpu.memory_space<vmem>>, vector<8x128xf32>
    %cst_23 = arith.constant dense<0.000000e+00> : vector<8x128xf32>
    %49 = tpu.matmul %46, %1, %cst_23 {dimension_numbers = #tpu.dot_dimension_numbers<[1], [0], [0], [1], [0, 0, 1, 1], [], []>} : vector<8x32xf32>, vector<32x128xf32>, vector<8x128xf32> -> vector<8x128xf32>
    %50 = arith.addf %48, %49 : vector<8x128xf32>
    %51 = arith.negf %50 : vector<8x128xf32>
    %52 = math.exp %51 : vector<8x128xf32>
    %cst_24 = arith.constant 1.000000e+00 : f32
    %53 = vector.broadcast %cst_24 : f32 to vector<8x128xf32>
    %54 = arith.addf %53, %52 : vector<8x128xf32>
    %55 = arith.divf %53, %54 : vector<8x128xf32>
    %56 = math.tanh %50 : vector<8x128xf32>
    %57 = vector.extract_strided_slice %55 {offsets = [0, 0], sizes = [8, 32], strides = [1, 1]} : vector<8x128xf32> to vector<8x32xf32>
    %58 = vector.extract_strided_slice %55 {offsets = [0, 32], sizes = [8, 32], strides = [1, 1]} : vector<8x128xf32> to vector<8x32xf32>
    %59 = vector.extract_strided_slice %56 {offsets = [0, 64], sizes = [8, 32], strides = [1, 1]} : vector<8x128xf32> to vector<8x32xf32>
    %60 = vector.extract_strided_slice %55 {offsets = [0, 96], sizes = [8, 32], strides = [1, 1]} : vector<8x128xf32> to vector<8x32xf32>
    %61 = arith.mulf %58, %44 : vector<8x32xf32>
    %62 = arith.mulf %57, %59 : vector<8x32xf32>
    %63 = arith.addf %61, %62 : vector<8x32xf32>
    %64 = math.tanh %63 : vector<8x32xf32>
    %65 = arith.mulf %60, %64 : vector<8x32xf32>
    %c16_25 = arith.constant 16 : index
    %c0_26 = arith.constant 0 : index
    %66 = vector.load %arg7[%c16_25, %c0_26] : memref<64x32xf32, #tpu.memory_space<vmem>>, vector<8x32xf32>
    tpu.vector_store %arg7[%c16_25, %c0_26], %65 {strides = array<i32>} : memref<64x32xf32, #tpu.memory_space<vmem>>, vector<8x32xf32>,
    %c24 = arith.constant 24 : index
    %c0_27 = arith.constant 0 : index
    %67 = vector.load %arg10[%c24, %c0_27] : memref<64x128xf32, #tpu.memory_space<vmem>>, vector<8x128xf32>
    %cst_28 = arith.constant dense<0.000000e+00> : vector<8x128xf32>
    %68 = tpu.matmul %65, %1, %cst_28 {dimension_numbers = #tpu.dot_dimension_numbers<[1], [0], [0], [1], [0, 0, 1, 1], [], []>} : vector<8x32xf32>, vector<32x128xf32>, vector<8x128xf32> -> vector<8x128xf32>
    %69 = arith.addf %67, %68 : vector<8x128xf32>
    %70 = arith.negf %69 : vector<8x128xf32>
    %71 = math.exp %70 : vector<8x128xf32>
    %cst_29 = arith.constant 1.000000e+00 : f32
    %72 = vector.broadcast %cst_29 : f32 to vector<8x128xf32>
    %73 = arith.addf %72, %71 : vector<8x128xf32>
    %74 = arith.divf %72, %73 : vector<8x128xf32>
    %75 = math.tanh %69 : vector<8x128xf32>
    %76 = vector.extract_strided_slice %74 {offsets = [0, 0], sizes = [8, 32], strides = [1, 1]} : vector<8x128xf32> to vector<8x32xf32>
    %77 = vector.extract_strided_slice %74 {offsets = [0, 32], sizes = [8, 32], strides = [1, 1]} : vector<8x128xf32> to vector<8x32xf32>
    %78 = vector.extract_strided_slice %75 {offsets = [0, 64], sizes = [8, 32], strides = [1, 1]} : vector<8x128xf32> to vector<8x32xf32>
    %79 = vector.extract_strided_slice %74 {offsets = [0, 96], sizes = [8, 32], strides = [1, 1]} : vector<8x128xf32> to vector<8x32xf32>
    %80 = arith.mulf %77, %63 : vector<8x32xf32>
    %81 = arith.mulf %76, %78 : vector<8x32xf32>
    %82 = arith.addf %80, %81 : vector<8x32xf32>
    %83 = math.tanh %82 : vector<8x32xf32>
    %84 = arith.mulf %79, %83 : vector<8x32xf32>
    %c24_30 = arith.constant 24 : index
    %c0_31 = arith.constant 0 : index
    %85 = vector.load %arg7[%c24_30, %c0_31] : memref<64x32xf32, #tpu.memory_space<vmem>>, vector<8x32xf32>
    tpu.vector_store %arg7[%c24_30, %c0_31], %84 {strides = array<i32>} : memref<64x32xf32, #tpu.memory_space<vmem>>, vector<8x32xf32>,
    %c32 = arith.constant 32 : index
    %c0_32 = arith.constant 0 : index
    %86 = vector.load %arg10[%c32, %c0_32] : memref<64x128xf32, #tpu.memory_space<vmem>>, vector<8x128xf32>
    %cst_33 = arith.constant dense<0.000000e+00> : vector<8x128xf32>
    %87 = tpu.matmul %84, %1, %cst_33 {dimension_numbers = #tpu.dot_dimension_numbers<[1], [0], [0], [1], [0, 0, 1, 1], [], []>} : vector<8x32xf32>, vector<32x128xf32>, vector<8x128xf32> -> vector<8x128xf32>
    %88 = arith.addf %86, %87 : vector<8x128xf32>
    %89 = arith.negf %88 : vector<8x128xf32>
    %90 = math.exp %89 : vector<8x128xf32>
    %cst_34 = arith.constant 1.000000e+00 : f32
    %91 = vector.broadcast %cst_34 : f32 to vector<8x128xf32>
    %92 = arith.addf %91, %90 : vector<8x128xf32>
    %93 = arith.divf %91, %92 : vector<8x128xf32>
    %94 = math.tanh %88 : vector<8x128xf32>
    %95 = vector.extract_strided_slice %93 {offsets = [0, 0], sizes = [8, 32], strides = [1, 1]} : vector<8x128xf32> to vector<8x32xf32>
    %96 = vector.extract_strided_slice %93 {offsets = [0, 32], sizes = [8, 32], strides = [1, 1]} : vector<8x128xf32> to vector<8x32xf32>
    %97 = vector.extract_strided_slice %94 {offsets = [0, 64], sizes = [8, 32], strides = [1, 1]} : vector<8x128xf32> to vector<8x32xf32>
    %98 = vector.extract_strided_slice %93 {offsets = [0, 96], sizes = [8, 32], strides = [1, 1]} : vector<8x128xf32> to vector<8x32xf32>
    %99 = arith.mulf %96, %82 : vector<8x32xf32>
    %100 = arith.mulf %95, %97 : vector<8x32xf32>
    %101 = arith.addf %99, %100 : vector<8x32xf32>
    %102 = math.tanh %101 : vector<8x32xf32>
    %103 = arith.mulf %98, %102 : vector<8x32xf32>
    %c32_35 = arith.constant 32 : index
    %c0_36 = arith.constant 0 : index
    %104 = vector.load %arg7[%c32_35, %c0_36] : memref<64x32xf32, #tpu.memory_space<vmem>>, vector<8x32xf32>
    tpu.vector_store %arg7[%c32_35, %c0_36], %103 {strides = array<i32>} : memref<64x32xf32, #tpu.memory_space<vmem>>, vector<8x32xf32>,
    %c40 = arith.constant 40 : index
    %c0_37 = arith.constant 0 : index
    %105 = vector.load %arg10[%c40, %c0_37] : memref<64x128xf32, #tpu.memory_space<vmem>>, vector<8x128xf32>
    %cst_38 = arith.constant dense<0.000000e+00> : vector<8x128xf32>
    %106 = tpu.matmul %103, %1, %cst_38 {dimension_numbers = #tpu.dot_dimension_numbers<[1], [0], [0], [1], [0, 0, 1, 1], [], []>} : vector<8x32xf32>, vector<32x128xf32>, vector<8x128xf32> -> vector<8x128xf32>
    %107 = arith.addf %105, %106 : vector<8x128xf32>
    %108 = arith.negf %107 : vector<8x128xf32>
    %109 = math.exp %108 : vector<8x128xf32>
    %cst_39 = arith.constant 1.000000e+00 : f32
    %110 = vector.broadcast %cst_39 : f32 to vector<8x128xf32>
    %111 = arith.addf %110, %109 : vector<8x128xf32>
    %112 = arith.divf %110, %111 : vector<8x128xf32>
    %113 = math.tanh %107 : vector<8x128xf32>
    %114 = vector.extract_strided_slice %112 {offsets = [0, 0], sizes = [8, 32], strides = [1, 1]} : vector<8x128xf32> to vector<8x32xf32>
    %115 = vector.extract_strided_slice %112 {offsets = [0, 32], sizes = [8, 32], strides = [1, 1]} : vector<8x128xf32> to vector<8x32xf32>
    %116 = vector.extract_strided_slice %113 {offsets = [0, 64], sizes = [8, 32], strides = [1, 1]} : vector<8x128xf32> to vector<8x32xf32>
    %117 = vector.extract_strided_slice %112 {offsets = [0, 96], sizes = [8, 32], strides = [1, 1]} : vector<8x128xf32> to vector<8x32xf32>
    %118 = arith.mulf %115, %101 : vector<8x32xf32>
    %119 = arith.mulf %114, %116 : vector<8x32xf32>
    %120 = arith.addf %118, %119 : vector<8x32xf32>
    %121 = math.tanh %120 : vector<8x32xf32>
    %122 = arith.mulf %117, %121 : vector<8x32xf32>
    %c40_40 = arith.constant 40 : index
    %c0_41 = arith.constant 0 : index
    %123 = vector.load %arg7[%c40_40, %c0_41] : memref<64x32xf32, #tpu.memory_space<vmem>>, vector<8x32xf32>
    tpu.vector_store %arg7[%c40_40, %c0_41], %122 {strides = array<i32>} : memref<64x32xf32, #tpu.memory_space<vmem>>, vector<8x32xf32>,
    %c48 = arith.constant 48 : index
    %c0_42 = arith.constant 0 : index
    %124 = vector.load %arg10[%c48, %c0_42] : memref<64x128xf32, #tpu.memory_space<vmem>>, vector<8x128xf32>
    %cst_43 = arith.constant dense<0.000000e+00> : vector<8x128xf32>
    %125 = tpu.matmul %122, %1, %cst_43 {dimension_numbers = #tpu.dot_dimension_numbers<[1], [0], [0], [1], [0, 0, 1, 1], [], []>} : vector<8x32xf32>, vector<32x128xf32>, vector<8x128xf32> -> vector<8x128xf32>
    %126 = arith.addf %124, %125 : vector<8x128xf32>
    %127 = arith.negf %126 : vector<8x128xf32>
    %128 = math.exp %127 : vector<8x128xf32>
    %cst_44 = arith.constant 1.000000e+00 : f32
    %129 = vector.broadcast %cst_44 : f32 to vector<8x128xf32>
    %130 = arith.addf %129, %128 : vector<8x128xf32>
    %131 = arith.divf %129, %130 : vector<8x128xf32>
    %132 = math.tanh %126 : vector<8x128xf32>
    %133 = vector.extract_strided_slice %131 {offsets = [0, 0], sizes = [8, 32], strides = [1, 1]} : vector<8x128xf32> to vector<8x32xf32>
    %134 = vector.extract_strided_slice %131 {offsets = [0, 32], sizes = [8, 32], strides = [1, 1]} : vector<8x128xf32> to vector<8x32xf32>
    %135 = vector.extract_strided_slice %132 {offsets = [0, 64], sizes = [8, 32], strides = [1, 1]} : vector<8x128xf32> to vector<8x32xf32>
    %136 = vector.extract_strided_slice %131 {offsets = [0, 96], sizes = [8, 32], strides = [1, 1]} : vector<8x128xf32> to vector<8x32xf32>
    %137 = arith.mulf %134, %120 : vector<8x32xf32>
    %138 = arith.mulf %133, %135 : vector<8x32xf32>
    %139 = arith.addf %137, %138 : vector<8x32xf32>
    %140 = math.tanh %139 : vector<8x32xf32>
    %141 = arith.mulf %136, %140 : vector<8x32xf32>
    %c48_45 = arith.constant 48 : index
    %c0_46 = arith.constant 0 : index
    %142 = vector.load %arg7[%c48_45, %c0_46] : memref<64x32xf32, #tpu.memory_space<vmem>>, vector<8x32xf32>
    tpu.vector_store %arg7[%c48_45, %c0_46], %141 {strides = array<i32>} : memref<64x32xf32, #tpu.memory_space<vmem>>, vector<8x32xf32>,
    %c56 = arith.constant 56 : index
    %c0_47 = arith.constant 0 : index
    %143 = vector.load %arg10[%c56, %c0_47] : memref<64x128xf32, #tpu.memory_space<vmem>>, vector<8x128xf32>
    %cst_48 = arith.constant dense<0.000000e+00> : vector<8x128xf32>
    %144 = tpu.matmul %141, %1, %cst_48 {dimension_numbers = #tpu.dot_dimension_numbers<[1], [0], [0], [1], [0, 0, 1, 1], [], []>} : vector<8x32xf32>, vector<32x128xf32>, vector<8x128xf32> -> vector<8x128xf32>
    %145 = arith.addf %143, %144 : vector<8x128xf32>
    %146 = arith.negf %145 : vector<8x128xf32>
    %147 = math.exp %146 : vector<8x128xf32>
    %cst_49 = arith.constant 1.000000e+00 : f32
    %148 = vector.broadcast %cst_49 : f32 to vector<8x128xf32>
    %149 = arith.addf %148, %147 : vector<8x128xf32>
    %150 = arith.divf %148, %149 : vector<8x128xf32>
    %151 = math.tanh %145 : vector<8x128xf32>
    %152 = vector.extract_strided_slice %150 {offsets = [0, 0], sizes = [8, 32], strides = [1, 1]} : vector<8x128xf32> to vector<8x32xf32>
    %153 = vector.extract_strided_slice %150 {offsets = [0, 32], sizes = [8, 32], strides = [1, 1]} : vector<8x128xf32> to vector<8x32xf32>
    %154 = vector.extract_strided_slice %151 {offsets = [0, 64], sizes = [8, 32], strides = [1, 1]} : vector<8x128xf32> to vector<8x32xf32>
    %155 = vector.extract_strided_slice %150 {offsets = [0, 96], sizes = [8, 32], strides = [1, 1]} : vector<8x128xf32> to vector<8x32xf32>
    %156 = arith.mulf %153, %139 : vector<8x32xf32>
    %157 = arith.mulf %152, %154 : vector<8x32xf32>
    %158 = arith.addf %156, %157 : vector<8x32xf32>
    %159 = math.tanh %158 : vector<8x32xf32>
    %160 = arith.mulf %155, %159 : vector<8x32xf32>
    %c56_50 = arith.constant 56 : index
    %c0_51 = arith.constant 0 : index
    %161 = vector.load %arg7[%c56_50, %c0_51] : memref<64x32xf32, #tpu.memory_space<vmem>>, vector<8x32xf32>
    tpu.vector_store %arg7[%c56_50, %c0_51], %160 {strides = array<i32>} : memref<64x32xf32, #tpu.memory_space<vmem>>, vector<8x32xf32>,
    %c0_52 = arith.constant 0 : index
    %c0_53 = arith.constant 0 : index
    %c0_54 = arith.constant 0 : index
    %162 = vector.load %arg8[%c0_52, %c0_53, %c0_54] : memref<2x8x32xf32, #tpu.memory_space<vmem>>, vector<1x8x32xf32>
    %163 = vector.shape_cast %162 : vector<1x8x32xf32> to vector<8x32xf32>
    %164 = vector.shape_cast %160 : vector<8x32xf32> to vector<1x8x32xf32>
    tpu.vector_store %arg8[%c0_52, %c0_53, %c0_54], %164 {strides = array<i32>} : memref<2x8x32xf32, #tpu.memory_space<vmem>>, vector<1x8x32xf32>,
    %c0_55 = arith.constant 0 : index
    %c0_56 = arith.constant 0 : index
    %c0_57 = arith.constant 0 : index
    %165 = vector.load %arg9[%c0_55, %c0_56, %c0_57] : memref<2x8x32xf32, #tpu.memory_space<vmem>>, vector<1x8x32xf32>
    %166 = vector.shape_cast %165 : vector<1x8x32xf32> to vector<8x32xf32>
    %167 = vector.shape_cast %158 : vector<8x32xf32> to vector<1x8x32xf32>
    tpu.vector_store %arg9[%c0_55, %c0_56, %c0_57], %167 {strides = array<i32>} : memref<2x8x32xf32, #tpu.memory_space<vmem>>, vector<1x8x32xf32>,
    %c0_58 = arith.constant 0 : index
    %c0_59 = arith.constant 0 : index
    %168 = vector.load %arg4[%c0_58, %c0_59] : memref<32x128xf32, #tpu.memory_space<vmem>>, vector<32x128xf32>
    %c0_60 = arith.constant 0 : index
    %c0_61 = arith.constant 0 : index
    %169 = vector.load %arg5[%c0_60, %c0_61] : memref<32x128xf32, #tpu.memory_space<vmem>>, vector<32x128xf32>
    %c0_62 = arith.constant 0 : index
    %c0_63 = arith.constant 0 : index
    %170 = vector.load %arg6[%c0_62, %c0_63] : memref<1x128xf32, #tpu.memory_space<vmem>>, vector<1x128xf32>
    %c0_64 = arith.constant 0 : index
    %c0_65 = arith.constant 0 : index
    %171 = vector.load %arg7[%c0_64, %c0_65] : memref<64x32xf32, #tpu.memory_space<vmem>>, vector<64x32xf32>
    %cst_66 = arith.constant dense<0.000000e+00> : vector<64x128xf32>
    %172 = tpu.matmul %171, %168, %cst_66 {dimension_numbers = #tpu.dot_dimension_numbers<[1], [0], [0], [1], [0, 0, 1, 1], [], []>} : vector<64x32xf32>, vector<32x128xf32>, vector<64x128xf32> -> vector<64x128xf32>
    %173 = vector.broadcast %170 : vector<1x128xf32> to vector<64x128xf32>
    %174 = arith.addf %172, %173 : vector<64x128xf32>
    %c0_67 = arith.constant 0 : index
    %c0_68 = arith.constant 0 : index
    %175 = vector.load %arg10[%c0_67, %c0_68] : memref<64x128xf32, #tpu.memory_space<vmem>>, vector<64x128xf32>
    tpu.vector_store %arg10[%c0_67, %c0_68], %174 {strides = array<i32>} : memref<64x128xf32, #tpu.memory_space<vmem>>, vector<64x128xf32>,
    %cst_69 = arith.constant 0.000000e+00 : f32
    %176 = vector.broadcast %cst_69 : f32 to vector<8x32xf32>
    %cst_70 = arith.constant 0.000000e+00 : f32
    %177 = vector.broadcast %cst_70 : f32 to vector<8x32xf32>
    %c0_71 = arith.constant 0 : index
    %c0_72 = arith.constant 0 : index
    %178 = vector.load %arg10[%c0_71, %c0_72] : memref<64x128xf32, #tpu.memory_space<vmem>>, vector<8x128xf32>
    %cst_73 = arith.constant dense<0.000000e+00> : vector<8x128xf32>
    %179 = tpu.matmul %176, %169, %cst_73 {dimension_numbers = #tpu.dot_dimension_numbers<[1], [0], [0], [1], [0, 0, 1, 1], [], []>} : vector<8x32xf32>, vector<32x128xf32>, vector<8x128xf32> -> vector<8x128xf32>
    %180 = arith.addf %178, %179 : vector<8x128xf32>
    %181 = arith.negf %180 : vector<8x128xf32>
    %182 = math.exp %181 : vector<8x128xf32>
    %cst_74 = arith.constant 1.000000e+00 : f32
    %183 = vector.broadcast %cst_74 : f32 to vector<8x128xf32>
    %184 = arith.addf %183, %182 : vector<8x128xf32>
    %185 = arith.divf %183, %184 : vector<8x128xf32>
    %186 = math.tanh %180 : vector<8x128xf32>
    %187 = vector.extract_strided_slice %185 {offsets = [0, 0], sizes = [8, 32], strides = [1, 1]} : vector<8x128xf32> to vector<8x32xf32>
    %188 = vector.extract_strided_slice %185 {offsets = [0, 32], sizes = [8, 32], strides = [1, 1]} : vector<8x128xf32> to vector<8x32xf32>
    %189 = vector.extract_strided_slice %186 {offsets = [0, 64], sizes = [8, 32], strides = [1, 1]} : vector<8x128xf32> to vector<8x32xf32>
    %190 = vector.extract_strided_slice %185 {offsets = [0, 96], sizes = [8, 32], strides = [1, 1]} : vector<8x128xf32> to vector<8x32xf32>
    %191 = arith.mulf %188, %177 : vector<8x32xf32>
    %192 = arith.mulf %187, %189 : vector<8x32xf32>
    %193 = arith.addf %191, %192 : vector<8x32xf32>
    %194 = math.tanh %193 : vector<8x32xf32>
    %195 = arith.mulf %190, %194 : vector<8x32xf32>
    %c0_75 = arith.constant 0 : index
    %c0_76 = arith.constant 0 : index
    %196 = vector.load %arg7[%c0_75, %c0_76] : memref<64x32xf32, #tpu.memory_space<vmem>>, vector<8x32xf32>
    tpu.vector_store %arg7[%c0_75, %c0_76], %195 {strides = array<i32>} : memref<64x32xf32, #tpu.memory_space<vmem>>, vector<8x32xf32>,
    %c8_77 = arith.constant 8 : index
    %c0_78 = arith.constant 0 : index
    %197 = vector.load %arg10[%c8_77, %c0_78] : memref<64x128xf32, #tpu.memory_space<vmem>>, vector<8x128xf32>
    %cst_79 = arith.constant dense<0.000000e+00> : vector<8x128xf32>
    %198 = tpu.matmul %195, %169, %cst_79 {dimension_numbers = #tpu.dot_dimension_numbers<[1], [0], [0], [1], [0, 0, 1, 1], [], []>} : vector<8x32xf32>, vector<32x128xf32>, vector<8x128xf32> -> vector<8x128xf32>
    %199 = arith.addf %197, %198 : vector<8x128xf32>
    %200 = arith.negf %199 : vector<8x128xf32>
    %201 = math.exp %200 : vector<8x128xf32>
    %cst_80 = arith.constant 1.000000e+00 : f32
    %202 = vector.broadcast %cst_80 : f32 to vector<8x128xf32>
    %203 = arith.addf %202, %201 : vector<8x128xf32>
    %204 = arith.divf %202, %203 : vector<8x128xf32>
    %205 = math.tanh %199 : vector<8x128xf32>
    %206 = vector.extract_strided_slice %204 {offsets = [0, 0], sizes = [8, 32], strides = [1, 1]} : vector<8x128xf32> to vector<8x32xf32>
    %207 = vector.extract_strided_slice %204 {offsets = [0, 32], sizes = [8, 32], strides = [1, 1]} : vector<8x128xf32> to vector<8x32xf32>
    %208 = vector.extract_strided_slice %205 {offsets = [0, 64], sizes = [8, 32], strides = [1, 1]} : vector<8x128xf32> to vector<8x32xf32>
    %209 = vector.extract_strided_slice %204 {offsets = [0, 96], sizes = [8, 32], strides = [1, 1]} : vector<8x128xf32> to vector<8x32xf32>
    %210 = arith.mulf %207, %193 : vector<8x32xf32>
    %211 = arith.mulf %206, %208 : vector<8x32xf32>
    %212 = arith.addf %210, %211 : vector<8x32xf32>
    %213 = math.tanh %212 : vector<8x32xf32>
    %214 = arith.mulf %209, %213 : vector<8x32xf32>
    %c8_81 = arith.constant 8 : index
    %c0_82 = arith.constant 0 : index
    %215 = vector.load %arg7[%c8_81, %c0_82] : memref<64x32xf32, #tpu.memory_space<vmem>>, vector<8x32xf32>
    tpu.vector_store %arg7[%c8_81, %c0_82], %214 {strides = array<i32>} : memref<64x32xf32, #tpu.memory_space<vmem>>, vector<8x32xf32>,
    %c16_83 = arith.constant 16 : index
    %c0_84 = arith.constant 0 : index
    %216 = vector.load %arg10[%c16_83, %c0_84] : memref<64x128xf32, #tpu.memory_space<vmem>>, vector<8x128xf32>
    %cst_85 = arith.constant dense<0.000000e+00> : vector<8x128xf32>
    %217 = tpu.matmul %214, %169, %cst_85 {dimension_numbers = #tpu.dot_dimension_numbers<[1], [0], [0], [1], [0, 0, 1, 1], [], []>} : vector<8x32xf32>, vector<32x128xf32>, vector<8x128xf32> -> vector<8x128xf32>
    %218 = arith.addf %216, %217 : vector<8x128xf32>
    %219 = arith.negf %218 : vector<8x128xf32>
    %220 = math.exp %219 : vector<8x128xf32>
    %cst_86 = arith.constant 1.000000e+00 : f32
    %221 = vector.broadcast %cst_86 : f32 to vector<8x128xf32>
    %222 = arith.addf %221, %220 : vector<8x128xf32>
    %223 = arith.divf %221, %222 : vector<8x128xf32>
    %224 = math.tanh %218 : vector<8x128xf32>
    %225 = vector.extract_strided_slice %223 {offsets = [0, 0], sizes = [8, 32], strides = [1, 1]} : vector<8x128xf32> to vector<8x32xf32>
    %226 = vector.extract_strided_slice %223 {offsets = [0, 32], sizes = [8, 32], strides = [1, 1]} : vector<8x128xf32> to vector<8x32xf32>
    %227 = vector.extract_strided_slice %224 {offsets = [0, 64], sizes = [8, 32], strides = [1, 1]} : vector<8x128xf32> to vector<8x32xf32>
    %228 = vector.extract_strided_slice %223 {offsets = [0, 96], sizes = [8, 32], strides = [1, 1]} : vector<8x128xf32> to vector<8x32xf32>
    %229 = arith.mulf %226, %212 : vector<8x32xf32>
    %230 = arith.mulf %225, %227 : vector<8x32xf32>
    %231 = arith.addf %229, %230 : vector<8x32xf32>
    %232 = math.tanh %231 : vector<8x32xf32>
    %233 = arith.mulf %228, %232 : vector<8x32xf32>
    %c16_87 = arith.constant 16 : index
    %c0_88 = arith.constant 0 : index
    %234 = vector.load %arg7[%c16_87, %c0_88] : memref<64x32xf32, #tpu.memory_space<vmem>>, vector<8x32xf32>
    tpu.vector_store %arg7[%c16_87, %c0_88], %233 {strides = array<i32>} : memref<64x32xf32, #tpu.memory_space<vmem>>, vector<8x32xf32>,
    %c24_89 = arith.constant 24 : index
    %c0_90 = arith.constant 0 : index
    %235 = vector.load %arg10[%c24_89, %c0_90] : memref<64x128xf32, #tpu.memory_space<vmem>>, vector<8x128xf32>
    %cst_91 = arith.constant dense<0.000000e+00> : vector<8x128xf32>
    %236 = tpu.matmul %233, %169, %cst_91 {dimension_numbers = #tpu.dot_dimension_numbers<[1], [0], [0], [1], [0, 0, 1, 1], [], []>} : vector<8x32xf32>, vector<32x128xf32>, vector<8x128xf32> -> vector<8x128xf32>
    %237 = arith.addf %235, %236 : vector<8x128xf32>
    %238 = arith.negf %237 : vector<8x128xf32>
    %239 = math.exp %238 : vector<8x128xf32>
    %cst_92 = arith.constant 1.000000e+00 : f32
    %240 = vector.broadcast %cst_92 : f32 to vector<8x128xf32>
    %241 = arith.addf %240, %239 : vector<8x128xf32>
    %242 = arith.divf %240, %241 : vector<8x128xf32>
    %243 = math.tanh %237 : vector<8x128xf32>
    %244 = vector.extract_strided_slice %242 {offsets = [0, 0], sizes = [8, 32], strides = [1, 1]} : vector<8x128xf32> to vector<8x32xf32>
    %245 = vector.extract_strided_slice %242 {offsets = [0, 32], sizes = [8, 32], strides = [1, 1]} : vector<8x128xf32> to vector<8x32xf32>
    %246 = vector.extract_strided_slice %243 {offsets = [0, 64], sizes = [8, 32], strides = [1, 1]} : vector<8x128xf32> to vector<8x32xf32>
    %247 = vector.extract_strided_slice %242 {offsets = [0, 96], sizes = [8, 32], strides = [1, 1]} : vector<8x128xf32> to vector<8x32xf32>
    %248 = arith.mulf %245, %231 : vector<8x32xf32>
    %249 = arith.mulf %244, %246 : vector<8x32xf32>
    %250 = arith.addf %248, %249 : vector<8x32xf32>
    %251 = math.tanh %250 : vector<8x32xf32>
    %252 = arith.mulf %247, %251 : vector<8x32xf32>
    %c24_93 = arith.constant 24 : index
    %c0_94 = arith.constant 0 : index
    %253 = vector.load %arg7[%c24_93, %c0_94] : memref<64x32xf32, #tpu.memory_space<vmem>>, vector<8x32xf32>
    tpu.vector_store %arg7[%c24_93, %c0_94], %252 {strides = array<i32>} : memref<64x32xf32, #tpu.memory_space<vmem>>, vector<8x32xf32>,
    %c32_95 = arith.constant 32 : index
    %c0_96 = arith.constant 0 : index
    %254 = vector.load %arg10[%c32_95, %c0_96] : memref<64x128xf32, #tpu.memory_space<vmem>>, vector<8x128xf32>
    %cst_97 = arith.constant dense<0.000000e+00> : vector<8x128xf32>
    %255 = tpu.matmul %252, %169, %cst_97 {dimension_numbers = #tpu.dot_dimension_numbers<[1], [0], [0], [1], [0, 0, 1, 1], [], []>} : vector<8x32xf32>, vector<32x128xf32>, vector<8x128xf32> -> vector<8x128xf32>
    %256 = arith.addf %254, %255 : vector<8x128xf32>
    %257 = arith.negf %256 : vector<8x128xf32>
    %258 = math.exp %257 : vector<8x128xf32>
    %cst_98 = arith.constant 1.000000e+00 : f32
    %259 = vector.broadcast %cst_98 : f32 to vector<8x128xf32>
    %260 = arith.addf %259, %258 : vector<8x128xf32>
    %261 = arith.divf %259, %260 : vector<8x128xf32>
    %262 = math.tanh %256 : vector<8x128xf32>
    %263 = vector.extract_strided_slice %261 {offsets = [0, 0], sizes = [8, 32], strides = [1, 1]} : vector<8x128xf32> to vector<8x32xf32>
    %264 = vector.extract_strided_slice %261 {offsets = [0, 32], sizes = [8, 32], strides = [1, 1]} : vector<8x128xf32> to vector<8x32xf32>
    %265 = vector.extract_strided_slice %262 {offsets = [0, 64], sizes = [8, 32], strides = [1, 1]} : vector<8x128xf32> to vector<8x32xf32>
    %266 = vector.extract_strided_slice %261 {offsets = [0, 96], sizes = [8, 32], strides = [1, 1]} : vector<8x128xf32> to vector<8x32xf32>
    %267 = arith.mulf %264, %250 : vector<8x32xf32>
    %268 = arith.mulf %263, %265 : vector<8x32xf32>
    %269 = arith.addf %267, %268 : vector<8x32xf32>
    %270 = math.tanh %269 : vector<8x32xf32>
    %271 = arith.mulf %266, %270 : vector<8x32xf32>
    %c32_99 = arith.constant 32 : index
    %c0_100 = arith.constant 0 : index
    %272 = vector.load %arg7[%c32_99, %c0_100] : memref<64x32xf32, #tpu.memory_space<vmem>>, vector<8x32xf32>
    tpu.vector_store %arg7[%c32_99, %c0_100], %271 {strides = array<i32>} : memref<64x32xf32, #tpu.memory_space<vmem>>, vector<8x32xf32>,
    %c40_101 = arith.constant 40 : index
    %c0_102 = arith.constant 0 : index
    %273 = vector.load %arg10[%c40_101, %c0_102] : memref<64x128xf32, #tpu.memory_space<vmem>>, vector<8x128xf32>
    %cst_103 = arith.constant dense<0.000000e+00> : vector<8x128xf32>
    %274 = tpu.matmul %271, %169, %cst_103 {dimension_numbers = #tpu.dot_dimension_numbers<[1], [0], [0], [1], [0, 0, 1, 1], [], []>} : vector<8x32xf32>, vector<32x128xf32>, vector<8x128xf32> -> vector<8x128xf32>
    %275 = arith.addf %273, %274 : vector<8x128xf32>
    %276 = arith.negf %275 : vector<8x128xf32>
    %277 = math.exp %276 : vector<8x128xf32>
    %cst_104 = arith.constant 1.000000e+00 : f32
    %278 = vector.broadcast %cst_104 : f32 to vector<8x128xf32>
    %279 = arith.addf %278, %277 : vector<8x128xf32>
    %280 = arith.divf %278, %279 : vector<8x128xf32>
    %281 = math.tanh %275 : vector<8x128xf32>
    %282 = vector.extract_strided_slice %280 {offsets = [0, 0], sizes = [8, 32], strides = [1, 1]} : vector<8x128xf32> to vector<8x32xf32>
    %283 = vector.extract_strided_slice %280 {offsets = [0, 32], sizes = [8, 32], strides = [1, 1]} : vector<8x128xf32> to vector<8x32xf32>
    %284 = vector.extract_strided_slice %281 {offsets = [0, 64], sizes = [8, 32], strides = [1, 1]} : vector<8x128xf32> to vector<8x32xf32>
    %285 = vector.extract_strided_slice %280 {offsets = [0, 96], sizes = [8, 32], strides = [1, 1]} : vector<8x128xf32> to vector<8x32xf32>
    %286 = arith.mulf %283, %269 : vector<8x32xf32>
    %287 = arith.mulf %282, %284 : vector<8x32xf32>
    %288 = arith.addf %286, %287 : vector<8x32xf32>
    %289 = math.tanh %288 : vector<8x32xf32>
    %290 = arith.mulf %285, %289 : vector<8x32xf32>
    %c40_105 = arith.constant 40 : index
    %c0_106 = arith.constant 0 : index
    %291 = vector.load %arg7[%c40_105, %c0_106] : memref<64x32xf32, #tpu.memory_space<vmem>>, vector<8x32xf32>
    tpu.vector_store %arg7[%c40_105, %c0_106], %290 {strides = array<i32>} : memref<64x32xf32, #tpu.memory_space<vmem>>, vector<8x32xf32>,
    %c48_107 = arith.constant 48 : index
    %c0_108 = arith.constant 0 : index
    %292 = vector.load %arg10[%c48_107, %c0_108] : memref<64x128xf32, #tpu.memory_space<vmem>>, vector<8x128xf32>
    %cst_109 = arith.constant dense<0.000000e+00> : vector<8x128xf32>
    %293 = tpu.matmul %290, %169, %cst_109 {dimension_numbers = #tpu.dot_dimension_numbers<[1], [0], [0], [1], [0, 0, 1, 1], [], []>} : vector<8x32xf32>, vector<32x128xf32>, vector<8x128xf32> -> vector<8x128xf32>
    %294 = arith.addf %292, %293 : vector<8x128xf32>
    %295 = arith.negf %294 : vector<8x128xf32>
    %296 = math.exp %295 : vector<8x128xf32>
    %cst_110 = arith.constant 1.000000e+00 : f32
    %297 = vector.broadcast %cst_110 : f32 to vector<8x128xf32>
    %298 = arith.addf %297, %296 : vector<8x128xf32>
    %299 = arith.divf %297, %298 : vector<8x128xf32>
    %300 = math.tanh %294 : vector<8x128xf32>
    %301 = vector.extract_strided_slice %299 {offsets = [0, 0], sizes = [8, 32], strides = [1, 1]} : vector<8x128xf32> to vector<8x32xf32>
    %302 = vector.extract_strided_slice %299 {offsets = [0, 32], sizes = [8, 32], strides = [1, 1]} : vector<8x128xf32> to vector<8x32xf32>
    %303 = vector.extract_strided_slice %300 {offsets = [0, 64], sizes = [8, 32], strides = [1, 1]} : vector<8x128xf32> to vector<8x32xf32>
    %304 = vector.extract_strided_slice %299 {offsets = [0, 96], sizes = [8, 32], strides = [1, 1]} : vector<8x128xf32> to vector<8x32xf32>
    %305 = arith.mulf %302, %288 : vector<8x32xf32>
    %306 = arith.mulf %301, %303 : vector<8x32xf32>
    %307 = arith.addf %305, %306 : vector<8x32xf32>
    %308 = math.tanh %307 : vector<8x32xf32>
    %309 = arith.mulf %304, %308 : vector<8x32xf32>
    %c48_111 = arith.constant 48 : index
    %c0_112 = arith.constant 0 : index
    %310 = vector.load %arg7[%c48_111, %c0_112] : memref<64x32xf32, #tpu.memory_space<vmem>>, vector<8x32xf32>
    tpu.vector_store %arg7[%c48_111, %c0_112], %309 {strides = array<i32>} : memref<64x32xf32, #tpu.memory_space<vmem>>, vector<8x32xf32>,
    %c56_113 = arith.constant 56 : index
    %c0_114 = arith.constant 0 : index
    %311 = vector.load %arg10[%c56_113, %c0_114] : memref<64x128xf32, #tpu.memory_space<vmem>>, vector<8x128xf32>
    %cst_115 = arith.constant dense<0.000000e+00> : vector<8x128xf32>
    %312 = tpu.matmul %309, %169, %cst_115 {dimension_numbers = #tpu.dot_dimension_numbers<[1], [0], [0], [1], [0, 0, 1, 1], [], []>} : vector<8x32xf32>, vector<32x128xf32>, vector<8x128xf32> -> vector<8x128xf32>
    %313 = arith.addf %311, %312 : vector<8x128xf32>
    %314 = arith.negf %313 : vector<8x128xf32>
    %315 = math.exp %314 : vector<8x128xf32>
    %cst_116 = arith.constant 1.000000e+00 : f32
    %316 = vector.broadcast %cst_116 : f32 to vector<8x128xf32>
    %317 = arith.addf %316, %315 : vector<8x128xf32>
    %318 = arith.divf %316, %317 : vector<8x128xf32>
    %319 = math.tanh %313 : vector<8x128xf32>
    %320 = vector.extract_strided_slice %318 {offsets = [0, 0], sizes = [8, 32], strides = [1, 1]} : vector<8x128xf32> to vector<8x32xf32>
    %321 = vector.extract_strided_slice %318 {offsets = [0, 32], sizes = [8, 32], strides = [1, 1]} : vector<8x128xf32> to vector<8x32xf32>
    %322 = vector.extract_strided_slice %319 {offsets = [0, 64], sizes = [8, 32], strides = [1, 1]} : vector<8x128xf32> to vector<8x32xf32>
    %323 = vector.extract_strided_slice %318 {offsets = [0, 96], sizes = [8, 32], strides = [1, 1]} : vector<8x128xf32> to vector<8x32xf32>
    %324 = arith.mulf %321, %307 : vector<8x32xf32>
    %325 = arith.mulf %320, %322 : vector<8x32xf32>
    %326 = arith.addf %324, %325 : vector<8x32xf32>
    %327 = math.tanh %326 : vector<8x32xf32>
    %328 = arith.mulf %323, %327 : vector<8x32xf32>
    %c56_117 = arith.constant 56 : index
    %c0_118 = arith.constant 0 : index
    %329 = vector.load %arg7[%c56_117, %c0_118] : memref<64x32xf32, #tpu.memory_space<vmem>>, vector<8x32xf32>
    tpu.vector_store %arg7[%c56_117, %c0_118], %328 {strides = array<i32>} : memref<64x32xf32, #tpu.memory_space<vmem>>, vector<8x32xf32>,
    %c1 = arith.constant 1 : index
    %c0_119 = arith.constant 0 : index
    %c0_120 = arith.constant 0 : index
    %330 = vector.load %arg8[%c1, %c0_119, %c0_120] : memref<2x8x32xf32, #tpu.memory_space<vmem>>, vector<1x8x32xf32>
    %331 = vector.shape_cast %330 : vector<1x8x32xf32> to vector<8x32xf32>
    %332 = vector.shape_cast %328 : vector<8x32xf32> to vector<1x8x32xf32>
    tpu.vector_store %arg8[%c1, %c0_119, %c0_120], %332 {strides = array<i32>} : memref<2x8x32xf32, #tpu.memory_space<vmem>>, vector<1x8x32xf32>,
    %c1_121 = arith.constant 1 : index
    %c0_122 = arith.constant 0 : index
    %c0_123 = arith.constant 0 : index
    %333 = vector.load %arg9[%c1_121, %c0_122, %c0_123] : memref<2x8x32xf32, #tpu.memory_space<vmem>>, vector<1x8x32xf32>
    %334 = vector.shape_cast %333 : vector<1x8x32xf32> to vector<8x32xf32>
    %335 = vector.shape_cast %326 : vector<8x32xf32> to vector<1x8x32xf32>
    tpu.vector_store %arg9[%c1_121, %c0_122, %c0_123], %335 {strides = array<i32>} : memref<2x8x32xf32, #tpu.memory_space<vmem>>, vector<1x8x32xf32>,
    return
  }
}

</mosaic_0001>

<llo_original>
// kernel: tpu_custom_call.1
$region0: #{tpu_custom_call.1}
  #allocation0 [shape = 'u32[]', space=smem, size = 0x4, offset = 0x4, fixed_abs, tag = 'smem constant byte address 0x4 - core index']
  #allocation1 [shape = 'u32[144,128]{1,0:T(1,128)}', space=vmem, size = 0x12000, scoped, tag = 'internal scratch']
  #allocation2 [shape = 'f32[64,128]{1,0:T(8,128)}', space=vmem, size = 0x8000, scoped, tag = 'scratch operand']
  %s0 = inlined_call_operand.vmem [shape: f32[64,16], index: 0, kind: input, shape index: {}]
  %s1 = inlined_call_operand.hbm [shape: f32[16,128], index: 1, kind: input, shape index: {}]
  %s2 = inlined_call_operand.vmem [shape: f32[32,128], index: 2, kind: input, shape index: {}]
  %s3 = inlined_call_operand.vmem [shape: f32[1,128], index: 3, kind: input, shape index: {}]
  %s4 = inlined_call_operand.vmem [shape: f32[32,128], index: 4, kind: input, shape index: {}]
  %s5 = inlined_call_operand.vmem [shape: f32[32,128], index: 5, kind: input, shape index: {}]
  %s6 = inlined_call_operand.vmem [shape: f32[1,128], index: 6, kind: input, shape index: {}]
  %s7 = inlined_call_operand.vmem [shape: f32[64,32], index: 7, kind: output, shape index: {0}]
  %s8 = inlined_call_operand.hbm [shape: f32[2,8,32], index: 8, kind: output, shape index: {1}]
  %s9 = inlined_call_operand.hbm [shape: f32[2,8,32], index: 9, kind: output, shape index: {2}]
  %10 = xla_tuple %s7, %s8, %s9
  %s11 = sld [smem:[#allocation0]]
  $region58: #{tpu_custom_call.1} parent=0
    _
  %s13 = ssub.s32 1, %s11
  %s14 = scalar_select 0, %s13, %s11
  $region1: #{tpu_custom_call.1} parent=0
    #allocation3 [shape = 'u8[8192]{0}', space=vmem, size = 0x2000, scoped, tag = 'input window, operand 1, single buffered']
    #allocation4 [shape = 's32[1]{0}', space=sflag, size = 0x4, scoped, tag = 'scoped memory for tpu_custom_call.1']
    #allocation5 [shape = 's32[1]{0}', space=sflag, size = 0x4, scoped, tag = 'scoped memory for tpu_custom_call.1']
    #allocation6 [shape = 'u8[8192]{0}', space=vmem, size = 0x2000, scoped, tag = 'output window, operand 1, single buffered']
    #allocation7 [shape = 'u8[8192]{0}', space=vmem, size = 0x2000, scoped, tag = 'output window, operand 2, single buffered']
    #allocation8 [shape = 's32[1]{0}', space=sflag, size = 0x4, scoped, tag = 'scoped memory for tpu_custom_call.1']
    %15 = vsyncpa [#allocation4], 0
    %16 = vsyncpa [#allocation5], 0
    %17 = vsyncpa [#allocation8], 0
    // Predicated region
    $region2: #{tpu_custom_call.1} parent=1 // pred_check
      _
    $region3: #{tpu_custom_call.1} parent=1 // pred_check_branch
      %19 = sbr.rel (0) target = $region5
    $region4: #{tpu_custom_call.1} parent=1 // pred_region
      _
    $region5: #{tpu_custom_call.1} parent=1 // pred_fallthru
      _
    // Predicated region
    $region6: #{tpu_custom_call.1} parent=1 // pred_check
      _
    $region7: #{tpu_custom_call.1} parent=1 // pred_check_branch
      %21 = sbr.rel (0) target = $region9
    $region8: #{tpu_custom_call.1} parent=1 // pred_region
      %s23 = ssub.s32 256, 256
      %24 = vsyncadd [#allocation4], %s23
      %s25 = sshll.u32 [#allocation3], 4
      %s26 = int_to_ptr.vmem [resolvable:$true] %s25
      %31 = dma.hbm_to_vmem [thread:$0]  %s1, 256, %s26, [#allocation4], 128, 128, 8
    $region9: #{tpu_custom_call.1} parent=1 // pred_fallthru
      _
    // Predicated region
    $region10: #{tpu_custom_call.1} parent=1 // pred_check
      _
    $region11: #{tpu_custom_call.1} parent=1 // pred_check_branch
      %33 = sbr.rel (0) target = $region13
    $region12: #{tpu_custom_call.1} parent=1 // pred_region
      _
    $region13: #{tpu_custom_call.1} parent=1 // pred_fallthru
      _
    // Predicated region
    $region14: #{tpu_custom_call.1} parent=1 // pred_check
      _
    $region15: #{tpu_custom_call.1} parent=1 // pred_check_branch
      %35 = sbr.rel (0) target = $region17
    $region16: #{tpu_custom_call.1} parent=1 // pred_region
      _
    $region17: #{tpu_custom_call.1} parent=1 // pred_fallthru
      _
    // Predicated region
    $region18: #{tpu_custom_call.1} parent=1 // pred_check
      _
    $region19: #{tpu_custom_call.1} parent=1 // pred_check_branch
      %37 = sbr.rel (0) target = $region21
    $region20: #{tpu_custom_call.1} parent=1 // pred_region
      _
    $region21: #{tpu_custom_call.1} parent=1 // pred_fallthru
      _
    // Predicated region
    $region22: #{tpu_custom_call.1} parent=1 // pred_check
      _
    $region23: #{tpu_custom_call.1} parent=1 // pred_check_branch
      %39 = sbr.rel (0) target = $region25
    $region24: #{tpu_custom_call.1} parent=1 // pred_region
      _
    $region25: #{tpu_custom_call.1} parent=1 // pred_fallthru
      _
    // Predicated region
    $region26: #{tpu_custom_call.1} parent=1 // pred_check
      _
    $region27: #{tpu_custom_call.1} parent=1 // pred_check_branch
      %41 = sbr.rel (0) target = $region29
    $region28: #{tpu_custom_call.1} parent=1 // pred_region
      _
    $region29: #{tpu_custom_call.1} parent=1 // pred_fallthru
      _
    // Predicated region
    $region30: #{tpu_custom_call.1} parent=1 // pred_check
      _
    $region31: #{tpu_custom_call.1} parent=1 // pred_check_branch
      %43 = sbr.rel (0) target = $region33
    $region32: #{tpu_custom_call.1} parent=1 // pred_region
      %44 = dma.done [#allocation4], 256
    $region33: #{tpu_custom_call.1} parent=1 // pred_fallthru
      _
    %v45 = vld [vmem:[#allocation3] sm:$0xff]
    %v46 = vld [vmem:[#allocation3 + $0x8] sm:$0xff]
    %v47 = vld [vmem:[%s2] sm:$0xff]
    %v48 = vld [vmem:[%s2 + $0x8] sm:$0xff]
    %v49 = vld [vmem:[%s2 + $0x10] sm:$0xff]
    %v50 = vld [vmem:[%s2 + $0x18] sm:$0xff]
    %v51 = vld [vmem:[%s3] sm:$0x1]
    %v52 = vld [vmem:[%s0] sm:$0xff]
    %v53 = vld [vmem:[%s0 + $0x8] sm:$0xff]
    %v54 = vld [vmem:[%s0 + $0x10] sm:$0xff]
    %v55 = vld [vmem:[%s0 + $0x18] sm:$0xff]
    %v56 = vld [vmem:[%s0 + $0x20] sm:$0xff]
    %v57 = vld [vmem:[%s0 + $0x28] sm:$0xff]
    %v58 = vld [vmem:[%s0 + $0x30] sm:$0xff]
    %v59 = vld [vmem:[%s0 + $0x38] sm:$0xff]
    %v61 = vlaneseq
    %v62 = vshrl.u32 %v61, 7
    %v63 = vsub.s32 0, %v62
    %v64 = vrot.slane %v51, %v63
    %vm66 = vcmask 130048
    %v68 = vsel %vm66, %v52, 0
    %v71 = vsel %vm66, %v53, 0
    %v74 = vsel %vm66, %v54, 0
    %v77 = vsel %vm66, %v55, 0
    %v80 = vsel %vm66, %v56, 0
    %v83 = vsel %vm66, %v57, 0
    %v86 = vsel %vm66, %v58, 0
    %v89 = vsel %vm66, %v59, 0
    %91 = vmatprep.subr.mxu0 0.0
    %92 = vmatpush1.msra.mxu0 %v45
    %93 = vmatprep.subr.mxu0 0.0
    %94 = vmatpush1.msra.mxu0 %v46
    %95 = vmatprep.subr.mxu0 0.0
    %96 = vmatpush1.msra.mxu0 0.0
    %97 = vmatprep.subr.mxu0 0.0
    %98 = vmatpush1.msra.mxu0 0.0
    %99 = vmatprep.subr.mxu0 0.0
    %100 = vmatpush1.msra.mxu0 0.0
    %101 = vmatprep.subr.mxu0 0.0
    %102 = vmatpush1.msra.mxu0 0.0
    %103 = vmatprep.subr.mxu0 0.0
    %104 = vmatpush1.msra.mxu0 0.0
    %105 = vmatprep.subr.mxu0 0.0
    %106 = vmatpush1.msra.mxu0 0.0
    %107 = vmatprep.subr.mxu0 0.0
    %108 = vmatpush1.msra.mxu0 0.0
    %109 = vmatprep.subr.mxu0 0.0
    %110 = vmatpush1.msra.mxu0 0.0
    %111 = vmatprep.subr.mxu0 0.0
    %112 = vmatpush1.msra.mxu0 0.0
    %113 = vmatprep.subr.mxu0 0.0
    %114 = vmatpush1.msra.mxu0 0.0
    %115 = vmatprep.subr.mxu0 0.0
    %116 = vmatpush1.msra.mxu0 0.0
    %117 = vmatprep.subr.mxu0 0.0
    %118 = vmatpush1.msra.mxu0 0.0
    %119 = vmatprep.subr.mxu0 0.0
    %120 = vmatpush1.msra.mxu0 0.0
    %121 = vmatprep.subr.mxu0 0.0
    %122 = vmatpush1.msra.mxu0 0.0
    %123 = vmatprep.subr.mxu0 0.0
    %124 = vmatpush1.msra.mxu0 0.0
    %125 = vmatprep.subr.mxu0 0.0
    %126 = vmatpush1.msra.mxu0 0.0
    %127 = vmatprep.subr.mxu0 0.0
    %128 = vmatpush1.msra.mxu0 0.0
    %129 = vmatprep.subr.mxu0 0.0
    %130 = vmatpush1.msra.mxu0 0.0
    %131 = vmatprep.subr.mxu0 0.0
    %132 = vmatpush1.msra.mxu0 0.0
    %133 = vmatprep.subr.mxu0 0.0
    %134 = vmatpush1.msra.mxu0 0.0
    %135 = vmatprep.subr.mxu0 0.0
    %136 = vmatpush1.msra.mxu0 0.0
    %137 = vmatprep.subr.mxu0 0.0
    %138 = vmatpush1.msra.mxu0 0.0
    %139 = vmatprep.subr.mxu0 0.0
    %140 = vmatpush1.msra.mxu0 0.0
    %141 = vmatprep.subr.mxu0 0.0
    %142 = vmatpush1.msra.mxu0 0.0
    %143 = vmatprep.subr.mxu0 0.0
    %144 = vmatpush1.msra.mxu0 0.0
    %145 = vmatprep.subr.mxu0 0.0
    %146 = vmatpush1.msra.mxu0 0.0
    %147 = vmatprep.subr.mxu0 0.0
    %148 = vmatpush1.msra.mxu0 0.0
    %149 = vmatprep.subr.mxu0 0.0
    %150 = vmatpush1.msra.mxu0 0.0
    %151 = vmatprep.subr.mxu0 0.0
    %152 = vmatpush1.msra.mxu0 0.0
    %153 = vmatprep.subr.mxu0 0.0
    %154 = vmatpush1.msra.mxu0 0.0
    %155 = vmatprep.mubr.f32.mxu0 0.0
    %156 = vmatmul.mubr.f32.gmra.mrb[0].mxu0 %v68
    %v157 = vpop.f32.mrb[0].mxu0
    %v158 = vadd.f32 %v64, %v157
    %v159 = vpop.f32.mrb[0].mxu0
    %160 = vmatprep.mubr.f32.mxu0 0.0
    %161 = vmatmul.mubr.f32.gmra.mrb[0].mxu0 %v71
    %v162 = vpop.f32.mrb[0].mxu0
    %v163 = vadd.f32 %v64, %v162
    %v164 = vpop.f32.mrb[0].mxu0
    %165 = vmatprep.mubr.f32.mxu0 0.0
    %166 = vmatmul.mubr.f32.gmra.mrb[0].mxu0 %v74
    %v167 = vpop.f32.mrb[0].mxu0
    %v168 = vadd.f32 %v64, %v167
    %v169 = vpop.f32.mrb[0].mxu0
    %170 = vmatprep.mubr.f32.mxu0 0.0
    %171 = vmatmul.mubr.f32.gmra.mrb[0].mxu0 %v77
    %v172 = vpop.f32.mrb[0].mxu0
    %v173 = vadd.f32 %v64, %v172
    %v174 = vpop.f32.mrb[0].mxu0
    %175 = vmatprep.mubr.f32.mxu0 0.0
    %176 = vmatmul.mubr.f32.gmra.mrb[0].mxu0 %v80
    %v177 = vpop.f32.mrb[0].mxu0
    %v178 = vadd.f32 %v64, %v177
    %v179 = vpop.f32.mrb[0].mxu0
    %180 = vmatprep.mubr.f32.mxu0 0.0
    %181 = vmatmul.mubr.f32.gmra.mrb[0].mxu0 %v83
    %v182 = vpop.f32.mrb[0].mxu0
    %v183 = vadd.f32 %v64, %v182
    %v184 = vpop.f32.mrb[0].mxu0
    %185 = vmatprep.mubr.f32.mxu0 0.0
    %186 = vmatmul.mubr.f32.gmra.mrb[0].mxu0 %v86
    %v187 = vpop.f32.mrb[0].mxu0
    %v188 = vadd.f32 %v64, %v187
    %v189 = vpop.f32.mrb[0].mxu0
    %190 = vmatprep.mubr.f32.mxu0 0.0
    %191 = vmatmul.mubr.f32.gmra.mrb[0].mxu0 %v89
    %v192 = vpop.f32.mrb[0].mxu0
    %v193 = vadd.f32 %v64, %v192
    %v194 = vpop.f32.mrb[0].mxu0
    %195 = vdwg.mxu0
    %196 = vst [vmem:[#allocation2] sm:$0xff] %v158
    %197 = vst [vmem:[#allocation2 + $0x8] sm:$0xff] %v163
    %198 = vst [vmem:[#allocation2 + $0x10] sm:$0xff] %v168
    %199 = vst [vmem:[#allocation2 + $0x18] sm:$0xff] %v173
    %200 = vst [vmem:[#allocation2 + $0x20] sm:$0xff] %v178
    %201 = vst [vmem:[#allocation2 + $0x28] sm:$0xff] %v183
    %202 = vst [vmem:[#allocation2 + $0x30] sm:$0xff] %v188
    %203 = vst [vmem:[#allocation2 + $0x38] sm:$0xff] %v193
    %v204 = vld [vmem:[#allocation2] sm:$0xff]
    %vm205 = vcmask 261120
    %v207 = vsel %vm205, 0.0, 0
    %209 = vmatprep.subr.mxu0 0.0
    %210 = vmatpush1.msra.mxu0 %v47
    %211 = vmatprep.subr.mxu0 0.0
    %212 = vmatpush1.msra.mxu0 %v48
    %213 = vmatprep.subr.mxu0 0.0
    %214 = vmatpush1.msra.mxu0 %v49
    %215 = vmatprep.subr.mxu0 0.0
    %216 = vmatpush1.msra.mxu0 %v50
    %217 = vmatprep.subr.mxu0 0.0
    %218 = vmatpush1.msra.mxu0 0.0
    %219 = vmatprep.subr.mxu0 0.0
    %220 = vmatpush1.msra.mxu0 0.0
    %221 = vmatprep.subr.mxu0 0.0
    %222 = vmatpush1.msra.mxu0 0.0
    %223 = vmatprep.subr.mxu0 0.0
    %224 = vmatpush1.msra.mxu0 0.0
    %225 = vmatprep.subr.mxu0 0.0
    %226 = vmatpush1.msra.mxu0 0.0
    %227 = vmatprep.subr.mxu0 0.0
    %228 = vmatpush1.msra.mxu0 0.0
    %229 = vmatprep.subr.mxu0 0.0
    %230 = vmatpush1.msra.mxu0 0.0
    %231 = vmatprep.subr.mxu0 0.0
    %232 = vmatpush1.msra.mxu0 0.0
    %233 = vmatprep.subr.mxu0 0.0
    %234 = vmatpush1.msra.mxu0 0.0
    %235 = vmatprep.subr.mxu0 0.0
    %236 = vmatpush1.msra.mxu0 0.0
    %237 = vmatprep.subr.mxu0 0.0
    %238 = vmatpush1.msra.mxu0 0.0
    %239 = vmatprep.subr.mxu0 0.0
    %240 = vmatpush1.msra.mxu0 0.0
    %241 = vmatprep.subr.mxu0 0.0
    %242 = vmatpush1.msra.mxu0 0.0
    %243 = vmatprep.subr.mxu0 0.0
    %244 = vmatpush1.msra.mxu0 0.0
    %245 = vmatprep.subr.mxu0 0.0
    %246 = vmatpush1.msra.mxu0 0.0
    %247 = vmatprep.subr.mxu0 0.0
    %248 = vmatpush1.msra.mxu0 0.0
    %249 = vmatprep.subr.mxu0 0.0
    %250 = vmatpush1.msra.mxu0 0.0
    %251 = vmatprep.subr.mxu0 0.0
    %252 = vmatpush1.msra.mxu0 0.0
    %253 = vmatprep.subr.mxu0 0.0
    %254 = vmatpush1.msra.mxu0 0.0
    %255 = vmatprep.subr.mxu0 0.0
    %256 = vmatpush1.msra.mxu0 0.0
    %257 = vmatprep.subr.mxu0 0.0
    %258 = vmatpush1.msra.mxu0 0.0
    %259 = vmatprep.subr.mxu0 0.0
    %260 = vmatpush1.msra.mxu0 0.0
    %261 = vmatprep.subr.mxu0 0.0
    %262 = vmatpush1.msra.mxu0 0.0
    %263 = vmatprep.subr.mxu0 0.0
    %264 = vmatpush1.msra.mxu0 0.0
    %265 = vmatprep.subr.mxu0 0.0
    %266 = vmatpush1.msra.mxu0 0.0
    %267 = vmatprep.subr.mxu0 0.0
    %268 = vmatpush1.msra.mxu0 0.0
    %269 = vmatprep.subr.mxu0 0.0
    %270 = vmatpush1.msra.mxu0 0.0
    %271 = vmatprep.subr.mxu0 0.0
    %272 = vmatpush1.msra.mxu0 0.0
    %273 = vmatprep.mubr.f32.mxu0 0.0
    %274 = vmatmul.mubr.f32.gmra.mrb[0].mxu0 %v207
    %v275 = vpop.f32.mrb[0].mxu0
    %v276 = vadd.f32 0.0, %v275
    %v277 = vpop.f32.mrb[0].mxu0
    %278 = vdwg.mxu0
    %v279 = vadd.f32 %v204, %v276
    %v280 = vxor.u32 %v279, 2147483648
    %v281 = vmul.f32 %v280, 1.442695
    %v282 = vpow.pop %v281
    %v283 = vadd.f32 %v282, 1.0
    %v284 = vrcp.pop %v283
    %v285 = vmul.f32 1.0, %v284
    %v286 = vtanh.pop %v279
    %v287 = vmul.f32 %v285, 0.0
    %289 = vrot.lane.b32.xlu0 %v286, 64
    %v290 = vpop.permute.xlu0 %289
    %v292 = vmul.f32 %v285, %v290
    %294 = vrot.lane.b32.xlu0 %v292, 32
    %v295 = vpop.permute.xlu0 %294
    %v297 = vadd.f32 %v287, %v295
    %v298 = vtanh.pop %v297
    %300 = vrot.lane.b32.xlu0 %v298, 64
    %v301 = vpop.permute.xlu0 %300
    %v303 = vmul.f32 %v285, %v301
    %305 = vrot.lane.b32.xlu0 %v303, 32
    %v306 = vpop.permute.xlu0 %305
    %308 = vst.msk [vmem:[%s7] sm:$0xff] %vm205, %v306
    %v309 = vld [vmem:[#allocation2 + $0x8] sm:$0xff]
    %v310 = vsel %vm205, %v306, 0
    %312 = vmatprep.subr.mxu0 0.0
    %313 = vmatpush1.msra.mxu0 %v47
    %314 = vmatprep.subr.mxu0 0.0
    %315 = vmatpush1.msra.mxu0 %v48
    %316 = vmatprep.subr.mxu0 0.0
    %317 = vmatpush1.msra.mxu0 %v49
    %318 = vmatprep.subr.mxu0 0.0
    %319 = vmatpush1.msra.mxu0 %v50
    %320 = vmatprep.subr.mxu0 0.0
    %321 = vmatpush1.msra.mxu0 0.0
    %322 = vmatprep.subr.mxu0 0.0
    %323 = vmatpush1.msra.mxu0 0.0
    %324 = vmatprep.subr.mxu0 0.0
    %325 = vmatpush1.msra.mxu0 0.0
    %326 = vmatprep.subr.mxu0 0.0
    %327 = vmatpush1.msra.mxu0 0.0
    %328 = vmatprep.subr.mxu0 0.0
    %329 = vmatpush1.msra.mxu0 0.0
    %330 = vmatprep.subr.mxu0 0.0
    %331 = vmatpush1.msra.mxu0 0.0
    %332 = vmatprep.subr.mxu0 0.0
    %333 = vmatpush1.msra.mxu0 0.0
    %334 = vmatprep.subr.mxu0 0.0
    %335 = vmatpush1.msra.mxu0 0.0
    %336 = vmatprep.subr.mxu0 0.0
    %337 = vmatpush1.msra.mxu0 0.0
    %338 = vmatprep.subr.mxu0 0.0
    %339 = vmatpush1.msra.mxu0 0.0
    %340 = vmatprep.subr.mxu0 0.0
    %341 = vmatpush1.msra.mxu0 0.0
    %342 = vmatprep.subr.mxu0 0.0
    %343 = vmatpush1.msra.mxu0 0.0
    %344 = vmatprep.subr.mxu0 0.0
    %345 = vmatpush1.msra.mxu0 0.0
    %346 = vmatprep.subr.mxu0 0.0
    %347 = vmatpush1.msra.mxu0 0.0
    %348 = vmatprep.subr.mxu0 0.0
    %349 = vmatpush1.msra.mxu0 0.0
    %350 = vmatprep.subr.mxu0 0.0
    %351 = vmatpush1.msra.mxu0 0.0
    %352 = vmatprep.subr.mxu0 0.0
    %353 = vmatpush1.msra.mxu0 0.0
    %354 = vmatprep.subr.mxu0 0.0
    %355 = vmatpush1.msra.mxu0 0.0
    %356 = vmatprep.subr.mxu0 0.0
    %357 = vmatpush1.msra.mxu0 0.0
    %358 = vmatprep.subr.mxu0 0.0
    %359 = vmatpush1.msra.mxu0 0.0
    %360 = vmatprep.subr.mxu0 0.0
    %361 = vmatpush1.msra.mxu0 0.0
    %362 = vmatprep.subr.mxu0 0.0
    %363 = vmatpush1.msra.mxu0 0.0
    %364 = vmatprep.subr.mxu0 0.0
    %365 = vmatpush1.msra.mxu0 0.0
    %366 = vmatprep.subr.mxu0 0.0
    %367 = vmatpush1.msra.mxu0 0.0
    %368 = vmatprep.subr.mxu0 0.0
    %369 = vmatpush1.msra.mxu0 0.0
    %370 = vmatprep.subr.mxu0 0.0
    %371 = vmatpush1.msra.mxu0 0.0
    %372 = vmatprep.subr.mxu0 0.0
    %373 = vmatpush1.msra.mxu0 0.0
    %374 = vmatprep.subr.mxu0 0.0
    %375 = vmatpush1.msra.mxu0 0.0
    %376 = vmatprep.mubr.f32.mxu0 0.0
    %377 = vmatmul.mubr.f32.gmra.mrb[0].mxu0 %v310
    %v378 = vpop.f32.mrb[0].mxu0
    %v379 = vadd.f32 0.0, %v378
    %v380 = vpop.f32.mrb[0].mxu0
    %381 = vdwg.mxu0
    %v382 = vadd.f32 %v309, %v379
    %v383 = vxor.u32 %v382, 2147483648
    %v384 = vmul.f32 %v383, 1.442695
    %v385 = vpow.pop %v384
    %v386 = vadd.f32 %v385, 1.0
    %v387 = vrcp.pop %v386
    %v388 = vmul.f32 1.0, %v387
    %v389 = vtanh.pop %v382
    %v390 = vmul.f32 %v388, %v297
    %392 = vrot.lane.b32.xlu0 %v389, 64
    %v393 = vpop.permute.xlu0 %392
    %v395 = vmul.f32 %v388, %v393
    %397 = vrot.lane.b32.xlu0 %v395, 32
    %v398 = vpop.permute.xlu0 %397
    %v400 = vadd.f32 %v390, %v398
    %v401 = vtanh.pop %v400
    %403 = vrot.lane.b32.xlu0 %v401, 64
    %v404 = vpop.permute.xlu0 %403
    %v406 = vmul.f32 %v388, %v404
    %408 = vrot.lane.b32.xlu0 %v406, 32
    %v409 = vpop.permute.xlu0 %408
    %411 = vst.msk [vmem:[%s7 + $0x8] sm:$0xff] %vm205, %v409
    %v412 = vld [vmem:[#allocation2 + $0x10] sm:$0xff]
    %v413 = vsel %vm205, %v409, 0
    %415 = vmatprep.subr.mxu0 0.0
    %416 = vmatpush1.msra.mxu0 %v47
    %417 = vmatprep.subr.mxu0 0.0
    %418 = vmatpush1.msra.mxu0 %v48
    %419 = vmatprep.subr.mxu0 0.0
    %420 = vmatpush1.msra.mxu0 %v49
    %421 = vmatprep.subr.mxu0 0.0
    %422 = vmatpush1.msra.mxu0 %v50
    %423 = vmatprep.subr.mxu0 0.0
    %424 = vmatpush1.msra.mxu0 0.0
    %425 = vmatprep.subr.mxu0 0.0
    %426 = vmatpush1.msra.mxu0 0.0
    %427 = vmatprep.subr.mxu0 0.0
    %428 = vmatpush1.msra.mxu0 0.0
    %429 = vmatprep.subr.mxu0 0.0
    %430 = vmatpush1.msra.mxu0 0.0
    %431 = vmatprep.subr.mxu0 0.0
    %432 = vmatpush1.msra.mxu0 0.0
    %433 = vmatprep.subr.mxu0 0.0
    %434 = vmatpush1.msra.mxu0 0.0
    %435 = vmatprep.subr.mxu0 0.0
    %436 = vmatpush1.msra.mxu0 0.0
    %437 = vmatprep.subr.mxu0 0.0
    %438 = vmatpush1.msra.mxu0 0.0
    %439 = vmatprep.subr.mxu0 0.0
    %440 = vmatpush1.msra.mxu0 0.0
    %441 = vmatprep.subr.mxu0 0.0
    %442 = vmatpush1.msra.mxu0 0.0
    %443 = vmatprep.subr.mxu0 0.0
    %444 = vmatpush1.msra.mxu0 0.0
    %445 = vmatprep.subr.mxu0 0.0
    %446 = vmatpush1.msra.mxu0 0.0
    %447 = vmatprep.subr.mxu0 0.0
    %448 = vmatpush1.msra.mxu0 0.0
    %449 = vmatprep.subr.mxu0 0.0
    %450 = vmatpush1.msra.mxu0 0.0
    %451 = vmatprep.subr.mxu0 0.0
    %452 = vmatpush1.msra.mxu0 0.0
    %453 = vmatprep.subr.mxu0 0.0
    %454 = vmatpush1.msra.mxu0 0.0
    %455 = vmatprep.subr.mxu0 0.0
    %456 = vmatpush1.msra.mxu0 0.0
    %457 = vmatprep.subr.mxu0 0.0
    %458 = vmatpush1.msra.mxu0 0.0
    %459 = vmatprep.subr.mxu0 0.0
    %460 = vmatpush1.msra.mxu0 0.0
    %461 = vmatprep.subr.mxu0 0.0
    %462 = vmatpush1.msra.mxu0 0.0
    %463 = vmatprep.subr.mxu0 0.0
    %464 = vmatpush1.msra.mxu0 0.0
    %465 = vmatprep.subr.mxu0 0.0
    %466 = vmatpush1.msra.mxu0 0.0
    %467 = vmatprep.subr.mxu0 0.0
    %468 = vmatpush1.msra.mxu0 0.0
    %469 = vmatprep.subr.mxu0 0.0
    %470 = vmatpush1.msra.mxu0 0.0
    %471 = vmatprep.subr.mxu0 0.0
    %472 = vmatpush1.msra.mxu0 0.0
    %473 = vmatprep.subr.mxu0 0.0
    %474 = vmatpush1.msra.mxu0 0.0
    %475 = vmatprep.subr.mxu0 0.0
    %476 = vmatpush1.msra.mxu0 0.0
    %477 = vmatprep.subr.mxu0 0.0
    %478 = vmatpush1.msra.mxu0 0.0
    %479 = vmatprep.mubr.f32.mxu0 0.0
    %480 = vmatmul.mubr.f32.gmra.mrb[0].mxu0 %v413
    %v481 = vpop.f32.mrb[0].mxu0
    %v482 = vadd.f32 0.0, %v481
    %v483 = vpop.f32.mrb[0].mxu0
    %484 = vdwg.mxu0
    %v485 = vadd.f32 %v412, %v482
    %v486 = vxor.u32 %v485, 2147483648
    %v487 = vmul.f32 %v486, 1.442695
    %v488 = vpow.pop %v487
    %v489 = vadd.f32 %v488, 1.0
    %v490 = vrcp.pop %v489
    %v491 = vmul.f32 1.0, %v490
    %v492 = vtanh.pop %v485
    %v493 = vmul.f32 %v491, %v400
    %495 = vrot.lane.b32.xlu0 %v492, 64
    %v496 = vpop.permute.xlu0 %495
    %v498 = vmul.f32 %v491, %v496
    %500 = vrot.lane.b32.xlu0 %v498, 32
    %v501 = vpop.permute.xlu0 %500
    %v503 = vadd.f32 %v493, %v501
    %v504 = vtanh.pop %v503
    %506 = vrot.lane.b32.xlu0 %v504, 64
    %v507 = vpop.permute.xlu0 %506
    %v509 = vmul.f32 %v491, %v507
    %511 = vrot.lane.b32.xlu0 %v509, 32
    %v512 = vpop.permute.xlu0 %511
    %514 = vst.msk [vmem:[%s7 + $0x10] sm:$0xff] %vm205, %v512
    %v515 = vld [vmem:[#allocation2 + $0x18] sm:$0xff]
    %v516 = vsel %vm205, %v512, 0
    %518 = vmatprep.subr.mxu0 0.0
    %519 = vmatpush1.msra.mxu0 %v47
    %520 = vmatprep.subr.mxu0 0.0
    %521 = vmatpush1.msra.mxu0 %v48
    %522 = vmatprep.subr.mxu0 0.0
    %523 = vmatpush1.msra.mxu0 %v49
    %524 = vmatprep.subr.mxu0 0.0
    %525 = vmatpush1.msra.mxu0 %v50
    %526 = vmatprep.subr.mxu0 0.0
    %527 = vmatpush1.msra.mxu0 0.0
    %528 = vmatprep.subr.mxu0 0.0
    %529 = vmatpush1.msra.mxu0 0.0
    %530 = vmatprep.subr.mxu0 0.0
    %531 = vmatpush1.msra.mxu0 0.0
    %532 = vmatprep.subr.mxu0 0.0
    %533 = vmatpush1.msra.mxu0 0.0
    %534 = vmatprep.subr.mxu0 0.0
    %535 = vmatpush1.msra.mxu0 0.0
    %536 = vmatprep.subr.mxu0 0.0
    %537 = vmatpush1.msra.mxu0 0.0
    %538 = vmatprep.subr.mxu0 0.0
    %539 = vmatpush1.msra.mxu0 0.0
    %540 = vmatprep.subr.mxu0 0.0
    %541 = vmatpush1.msra.mxu0 0.0
    %542 = vmatprep.subr.mxu0 0.0
    %543 = vmatpush1.msra.mxu0 0.0
    %544 = vmatprep.subr.mxu0 0.0
    %545 = vmatpush1.msra.mxu0 0.0
    %546 = vmatprep.subr.mxu0 0.0
    %547 = vmatpush1.msra.mxu0 0.0
    %548 = vmatprep.subr.mxu0 0.0
    %549 = vmatpush1.msra.mxu0 0.0
    %550 = vmatprep.subr.mxu0 0.0
    %551 = vmatpush1.msra.mxu0 0.0
    %552 = vmatprep.subr.mxu0 0.0
    %553 = vmatpush1.msra.mxu0 0.0
    %554 = vmatprep.subr.mxu0 0.0
    %555 = vmatpush1.msra.mxu0 0.0
    %556 = vmatprep.subr.mxu0 0.0
    %557 = vmatpush1.msra.mxu0 0.0
    %558 = vmatprep.subr.mxu0 0.0
    %559 = vmatpush1.msra.mxu0 0.0
    %560 = vmatprep.subr.mxu0 0.0
    %561 = vmatpush1.msra.mxu0 0.0
    %562 = vmatprep.subr.mxu0 0.0
    %563 = vmatpush1.msra.mxu0 0.0
    %564 = vmatprep.subr.mxu0 0.0
    %565 = vmatpush1.msra.mxu0 0.0
    %566 = vmatprep.subr.mxu0 0.0
    %567 = vmatpush1.msra.mxu0 0.0
    %568 = vmatprep.subr.mxu0 0.0
    %569 = vmatpush1.msra.mxu0 0.0
    %570 = vmatprep.subr.mxu0 0.0
    %571 = vmatpush1.msra.mxu0 0.0
    %572 = vmatprep.subr.mxu0 0.0
    %573 = vmatpush1.msra.mxu0 0.0
    %574 = vmatprep.subr.mxu0 0.0
    %575 = vmatpush1.msra.mxu0 0.0
    %576 = vmatprep.subr.mxu0 0.0
    %577 = vmatpush1.msra.mxu0 0.0
    %578 = vmatprep.subr.mxu0 0.0
    %579 = vmatpush1.msra.mxu0 0.0
    %580 = vmatprep.subr.mxu0 0.0
    %581 = vmatpush1.msra.mxu0 0.0
    %582 = vmatprep.mubr.f32.mxu0 0.0
    %583 = vmatmul.mubr.f32.gmra.mrb[0].mxu0 %v516
    %v584 = vpop.f32.mrb[0].mxu0
    %v585 = vadd.f32 0.0, %v584
    %v586 = vpop.f32.mrb[0].mxu0
    %587 = vdwg.mxu0
    %v588 = vadd.f32 %v515, %v585
    %v589 = vxor.u32 %v588, 2147483648
    %v590 = vmul.f32 %v589, 1.442695
    %v591 = vpow.pop %v590
    %v592 = vadd.f32 %v591, 1.0
    %v593 = vrcp.pop %v592
    %v594 = vmul.f32 1.0, %v593
    %v595 = vtanh.pop %v588
    %v596 = vmul.f32 %v594, %v503
    %598 = vrot.lane.b32.xlu0 %v595, 64
    %v599 = vpop.permute.xlu0 %598
    %v601 = vmul.f32 %v594, %v599
    %603 = vrot.lane.b32.xlu0 %v601, 32
    %v604 = vpop.permute.xlu0 %603
    %v606 = vadd.f32 %v596, %v604
    %v607 = vtanh.pop %v606
    %609 = vrot.lane.b32.xlu0 %v607, 64
    %v610 = vpop.permute.xlu0 %609
    %v612 = vmul.f32 %v594, %v610
    %614 = vrot.lane.b32.xlu0 %v612, 32
    %v615 = vpop.permute.xlu0 %614
    %617 = vst.msk [vmem:[%s7 + $0x18] sm:$0xff] %vm205, %v615
    %v618 = vld [vmem:[#allocation2 + $0x20] sm:$0xff]
    %v619 = vsel %vm205, %v615, 0
    %621 = vmatprep.subr.mxu0 0.0
    %622 = vmatpush1.msra.mxu0 %v47
    %623 = vmatprep.subr.mxu0 0.0
    %624 = vmatpush1.msra.mxu0 %v48
    %625 = vmatprep.subr.mxu0 0.0
    %626 = vmatpush1.msra.mxu0 %v49
    %627 = vmatprep.subr.mxu0 0.0
    %628 = vmatpush1.msra.mxu0 %v50
    %629 = vmatprep.subr.mxu0 0.0
    %630 = vmatpush1.msra.mxu0 0.0
    %631 = vmatprep.subr.mxu0 0.0
    %632 = vmatpush1.msra.mxu0 0.0
    %633 = vmatprep.subr.mxu0 0.0
    %634 = vmatpush1.msra.mxu0 0.0
    %635 = vmatprep.subr.mxu0 0.0
    %636 = vmatpush1.msra.mxu0 0.0
    %637 = vmatprep.subr.mxu0 0.0
    %638 = vmatpush1.msra.mxu0 0.0
    %639 = vmatprep.subr.mxu0 0.0
    %640 = vmatpush1.msra.mxu0 0.0
    %641 = vmatprep.subr.mxu0 0.0
    %642 = vmatpush1.msra.mxu0 0.0
    %643 = vmatprep.subr.mxu0 0.0
    %644 = vmatpush1.msra.mxu0 0.0
    %645 = vmatprep.subr.mxu0 0.0
    %646 = vmatpush1.msra.mxu0 0.0
    %647 = vmatprep.subr.mxu0 0.0
    %648 = vmatpush1.msra.mxu0 0.0
    %649 = vmatprep.subr.mxu0 0.0
    %650 = vmatpush1.msra.mxu0 0.0
    %651 = vmatprep.subr.mxu0 0.0
    %652 = vmatpush1.msra.mxu0 0.0
    %653 = vmatprep.subr.mxu0 0.0
    %654 = vmatpush1.msra.mxu0 0.0
    %655 = vmatprep.subr.mxu0 0.0
    %656 = vmatpush1.msra.mxu0 0.0
    %657 = vmatprep.subr.mxu0 0.0
    %658 = vmatpush1.msra.mxu0 0.0
    %659 = vmatprep.subr.mxu0 0.0
    %660 = vmatpush1.msra.mxu0 0.0
    %661 = vmatprep.subr.mxu0 0.0
    %662 = vmatpush1.msra.mxu0 0.0
    %663 = vmatprep.subr.mxu0 0.0
    %664 = vmatpush1.msra.mxu0 0.0
    %665 = vmatprep.subr.mxu0 0.0
    %666 = vmatpush1.msra.mxu0 0.0
    %667 = vmatprep.subr.mxu0 0.0
    %668 = vmatpush1.msra.mxu0 0.0
    %669 = vmatprep.subr.mxu0 0.0
    %670 = vmatpush1.msra.mxu0 0.0
    %671 = vmatprep.subr.mxu0 0.0
    %672 = vmatpush1.msra.mxu0 0.0
    %673 = vmatprep.subr.mxu0 0.0
    %674 = vmatpush1.msra.mxu0 0.0
    %675 = vmatprep.subr.mxu0 0.0
    %676 = vmatpush1.msra.mxu0 0.0
    %677 = vmatprep.subr.mxu0 0.0
    %678 = vmatpush1.msra.mxu0 0.0
    %679 = vmatprep.subr.mxu0 0.0
    %680 = vmatpush1.msra.mxu0 0.0
    %681 = vmatprep.subr.mxu0 0.0
    %682 = vmatpush1.msra.mxu0 0.0
    %683 = vmatprep.subr.mxu0 0.0
    %684 = vmatpush1.msra.mxu0 0.0
    %685 = vmatprep.mubr.f32.mxu0 0.0
    %686 = vmatmul.mubr.f32.gmra.mrb[0].mxu0 %v619
    %v687 = vpop.f32.mrb[0].mxu0
    %v688 = vadd.f32 0.0, %v687
    %v689 = vpop.f32.mrb[0].mxu0
    %690 = vdwg.mxu0
    %v691 = vadd.f32 %v618, %v688
    %v692 = vxor.u32 %v691, 2147483648
    %v693 = vmul.f32 %v692, 1.442695
    %v694 = vpow.pop %v693
    %v695 = vadd.f32 %v694, 1.0
    %v696 = vrcp.pop %v695
    %v697 = vmul.f32 1.0, %v696
    %v698 = vtanh.pop %v691
    %v699 = vmul.f32 %v697, %v606
    %701 = vrot.lane.b32.xlu0 %v698, 64
    %v702 = vpop.permute.xlu0 %701
    %v704 = vmul.f32 %v697, %v702
    %706 = vrot.lane.b32.xlu0 %v704, 32
    %v707 = vpop.permute.xlu0 %706
    %v709 = vadd.f32 %v699, %v707
    %v710 = vtanh.pop %v709
    %712 = vrot.lane.b32.xlu0 %v710, 64
    %v713 = vpop.permute.xlu0 %712
    %v715 = vmul.f32 %v697, %v713
    %717 = vrot.lane.b32.xlu0 %v715, 32
    %v718 = vpop.permute.xlu0 %717
    %720 = vst.msk [vmem:[%s7 + $0x20] sm:$0xff] %vm205, %v718
    %v721 = vld [vmem:[#allocation2 + $0x28] sm:$0xff]
    %v722 = vsel %vm205, %v718, 0
    %724 = vmatprep.subr.mxu0 0.0
    %725 = vmatpush1.msra.mxu0 %v47
    %726 = vmatprep.subr.mxu0 0.0
    %727 = vmatpush1.msra.mxu0 %v48
    %728 = vmatprep.subr.mxu0 0.0
    %729 = vmatpush1.msra.mxu0 %v49
    %730 = vmatprep.subr.mxu0 0.0
    %731 = vmatpush1.msra.mxu0 %v50
    %732 = vmatprep.subr.mxu0 0.0
    %733 = vmatpush1.msra.mxu0 0.0
    %734 = vmatprep.subr.mxu0 0.0
    %735 = vmatpush1.msra.mxu0 0.0
    %736 = vmatprep.subr.mxu0 0.0
    %737 = vmatpush1.msra.mxu0 0.0
    %738 = vmatprep.subr.mxu0 0.0
    %739 = vmatpush1.msra.mxu0 0.0
    %740 = vmatprep.subr.mxu0 0.0
    %741 = vmatpush1.msra.mxu0 0.0
    %742 = vmatprep.subr.mxu0 0.0
    %743 = vmatpush1.msra.mxu0 0.0
    %744 = vmatprep.subr.mxu0 0.0
    %745 = vmatpush1.msra.mxu0 0.0
    %746 = vmatprep.subr.mxu0 0.0
    %747 = vmatpush1.msra.mxu0 0.0
    %748 = vmatprep.subr.mxu0 0.0
    %749 = vmatpush1.msra.mxu0 0.0
    %750 = vmatprep.subr.mxu0 0.0
    %751 = vmatpush1.msra.mxu0 0.0
    %752 = vmatprep.subr.mxu0 0.0
    %753 = vmatpush1.msra.mxu0 0.0
    %754 = vmatprep.subr.mxu0 0.0
    %755 = vmatpush1.msra.mxu0 0.0
    %756 = vmatprep.subr.mxu0 0.0
    %757 = vmatpush1.msra.mxu0 0.0
    %758 = vmatprep.subr.mxu0 0.0
    %759 = vmatpush1.msra.mxu0 0.0
    %760 = vmatprep.subr.mxu0 0.0
    %761 = vmatpush1.msra.mxu0 0.0
    %762 = vmatprep.subr.mxu0 0.0
    %763 = vmatpush1.msra.mxu0 0.0
    %764 = vmatprep.subr.mxu0 0.0
    %765 = vmatpush1.msra.mxu0 0.0
    %766 = vmatprep.subr.mxu0 0.0
    %767 = vmatpush1.msra.mxu0 0.0
    %768 = vmatprep.subr.mxu0 0.0
    %769 = vmatpush1.msra.mxu0 0.0
    %770 = vmatprep.subr.mxu0 0.0
    %771 = vmatpush1.msra.mxu0 0.0
    %772 = vmatprep.subr.mxu0 0.0
    %773 = vmatpush1.msra.mxu0 0.0
    %774 = vmatprep.subr.mxu0 0.0
    %775 = vmatpush1.msra.mxu0 0.0
    %776 = vmatprep.subr.mxu0 0.0
    %777 = vmatpush1.msra.mxu0 0.0
    %778 = vmatprep.subr.mxu0 0.0
    %779 = vmatpush1.msra.mxu0 0.0
    %780 = vmatprep.subr.mxu0 0.0
    %781 = vmatpush1.msra.mxu0 0.0
    %782 = vmatprep.subr.mxu0 0.0
    %783 = vmatpush1.msra.mxu0 0.0
    %784 = vmatprep.subr.mxu0 0.0
    %785 = vmatpush1.msra.mxu0 0.0
    %786 = vmatprep.subr.mxu0 0.0
    %787 = vmatpush1.msra.mxu0 0.0
    %788 = vmatprep.mubr.f32.mxu0 0.0
    %789 = vmatmul.mubr.f32.gmra.mrb[0].mxu0 %v722
    %v790 = vpop.f32.mrb[0].mxu0
    %v791 = vadd.f32 0.0, %v790
    %v792 = vpop.f32.mrb[0].mxu0
    %793 = vdwg.mxu0
    %v794 = vadd.f32 %v721, %v791
    %v795 = vxor.u32 %v794, 2147483648
    %v796 = vmul.f32 %v795, 1.442695
    %v797 = vpow.pop %v796
    %v798 = vadd.f32 %v797, 1.0
    %v799 = vrcp.pop %v798
    %v800 = vmul.f32 1.0, %v799
    %v801 = vtanh.pop %v794
    %v802 = vmul.f32 %v800, %v709
    %804 = vrot.lane.b32.xlu0 %v801, 64
    %v805 = vpop.permute.xlu0 %804
    %v807 = vmul.f32 %v800, %v805
    %809 = vrot.lane.b32.xlu0 %v807, 32
    %v810 = vpop.permute.xlu0 %809
    %v812 = vadd.f32 %v802, %v810
    %v813 = vtanh.pop %v812
    %815 = vrot.lane.b32.xlu0 %v813, 64
    %v816 = vpop.permute.xlu0 %815
    %v818 = vmul.f32 %v800, %v816
    %820 = vrot.lane.b32.xlu0 %v818, 32
    %v821 = vpop.permute.xlu0 %820
    %823 = vst.msk [vmem:[%s7 + $0x28] sm:$0xff] %vm205, %v821
    %v824 = vld [vmem:[#allocation2 + $0x30] sm:$0xff]
    %v825 = vsel %vm205, %v821, 0
    %827 = vmatprep.subr.mxu0 0.0
    %828 = vmatpush1.msra.mxu0 %v47
    %829 = vmatprep.subr.mxu0 0.0
    %830 = vmatpush1.msra.mxu0 %v48
    %831 = vmatprep.subr.mxu0 0.0
    %832 = vmatpush1.msra.mxu0 %v49
    %833 = vmatprep.subr.mxu0 0.0
    %834 = vmatpush1.msra.mxu0 %v50
    %835 = vmatprep.subr.mxu0 0.0
    %836 = vmatpush1.msra.mxu0 0.0
    %837 = vmatprep.subr.mxu0 0.0
    %838 = vmatpush1.msra.mxu0 0.0
    %839 = vmatprep.subr.mxu0 0.0
    %840 = vmatpush1.msra.mxu0 0.0
    %841 = vmatprep.subr.mxu0 0.0
    %842 = vmatpush1.msra.mxu0 0.0
    %843 = vmatprep.subr.mxu0 0.0
    %844 = vmatpush1.msra.mxu0 0.0
    %845 = vmatprep.subr.mxu0 0.0
    %846 = vmatpush1.msra.mxu0 0.0
    %847 = vmatprep.subr.mxu0 0.0
    %848 = vmatpush1.msra.mxu0 0.0
    %849 = vmatprep.subr.mxu0 0.0
    %850 = vmatpush1.msra.mxu0 0.0
    %851 = vmatprep.subr.mxu0 0.0
    %852 = vmatpush1.msra.mxu0 0.0
    %853 = vmatprep.subr.mxu0 0.0
    %854 = vmatpush1.msra.mxu0 0.0
    %855 = vmatprep.subr.mxu0 0.0
    %856 = vmatpush1.msra.mxu0 0.0
    %857 = vmatprep.subr.mxu0 0.0
    %858 = vmatpush1.msra.mxu0 0.0
    %859 = vmatprep.subr.mxu0 0.0
    %860 = vmatpush1.msra.mxu0 0.0
    %861 = vmatprep.subr.mxu0 0.0
    %862 = vmatpush1.msra.mxu0 0.0
    %863 = vmatprep.subr.mxu0 0.0
    %864 = vmatpush1.msra.mxu0 0.0
    %865 = vmatprep.subr.mxu0 0.0
    %866 = vmatpush1.msra.mxu0 0.0
    %867 = vmatprep.subr.mxu0 0.0
    %868 = vmatpush1.msra.mxu0 0.0
    %869 = vmatprep.subr.mxu0 0.0
    %870 = vmatpush1.msra.mxu0 0.0
    %871 = vmatprep.subr.mxu0 0.0
    %872 = vmatpush1.msra.mxu0 0.0
    %873 = vmatprep.subr.mxu0 0.0
    %874 = vmatpush1.msra.mxu0 0.0
    %875 = vmatprep.subr.mxu0 0.0
    %876 = vmatpush1.msra.mxu0 0.0
    %877 = vmatprep.subr.mxu0 0.0
    %878 = vmatpush1.msra.mxu0 0.0
    %879 = vmatprep.subr.mxu0 0.0
    %880 = vmatpush1.msra.mxu0 0.0
    %881 = vmatprep.subr.mxu0 0.0
    %882 = vmatpush1.msra.mxu0 0.0
    %883 = vmatprep.subr.mxu0 0.0
    %884 = vmatpush1.msra.mxu0 0.0
    %885 = vmatprep.subr.mxu0 0.0
    %886 = vmatpush1.msra.mxu0 0.0
    %887 = vmatprep.subr.mxu0 0.0
    %888 = vmatpush1.msra.mxu0 0.0
    %889 = vmatprep.subr.mxu0 0.0
    %890 = vmatpush1.msra.mxu0 0.0
    %891 = vmatprep.mubr.f32.mxu0 0.0
    %892 = vmatmul.mubr.f32.gmra.mrb[0].mxu0 %v825
    %v893 = vpop.f32.mrb[0].mxu0
    %v894 = vadd.f32 0.0, %v893
    %v895 = vpop.f32.mrb[0].mxu0
    %896 = vdwg.mxu0
    %v897 = vadd.f32 %v824, %v894
    %v898 = vxor.u32 %v897, 2147483648
    %v899 = vmul.f32 %v898, 1.442695
    %v900 = vpow.pop %v899
    %v901 = vadd.f32 %v900, 1.0
    %v902 = vrcp.pop %v901
    %v903 = vmul.f32 1.0, %v902
    %v904 = vtanh.pop %v897
    %v905 = vmul.f32 %v903, %v812
    %907 = vrot.lane.b32.xlu0 %v904, 64
    %v908 = vpop.permute.xlu0 %907
    %v910 = vmul.f32 %v903, %v908
    %912 = vrot.lane.b32.xlu0 %v910, 32
    %v913 = vpop.permute.xlu0 %912
    %v915 = vadd.f32 %v905, %v913
    %v916 = vtanh.pop %v915
    %918 = vrot.lane.b32.xlu0 %v916, 64
    %v919 = vpop.permute.xlu0 %918
    %v921 = vmul.f32 %v903, %v919
    %923 = vrot.lane.b32.xlu0 %v921, 32
    %v924 = vpop.permute.xlu0 %923
    %926 = vst.msk [vmem:[%s7 + $0x30] sm:$0xff] %vm205, %v924
    %v927 = vld [vmem:[#allocation2 + $0x38] sm:$0xff]
    %v928 = vsel %vm205, %v924, 0
    %930 = vmatprep.subr.mxu0 0.0
    %931 = vmatpush1.msra.mxu0 %v47
    %932 = vmatprep.subr.mxu0 0.0
    %933 = vmatpush1.msra.mxu0 %v48
    %934 = vmatprep.subr.mxu0 0.0
    %935 = vmatpush1.msra.mxu0 %v49
    %936 = vmatprep.subr.mxu0 0.0
    %937 = vmatpush1.msra.mxu0 %v50
    %938 = vmatprep.subr.mxu0 0.0
    %939 = vmatpush1.msra.mxu0 0.0
    %940 = vmatprep.subr.mxu0 0.0
    %941 = vmatpush1.msra.mxu0 0.0
    %942 = vmatprep.subr.mxu0 0.0
    %943 = vmatpush1.msra.mxu0 0.0
    %944 = vmatprep.subr.mxu0 0.0
    %945 = vmatpush1.msra.mxu0 0.0
    %946 = vmatprep.subr.mxu0 0.0
    %947 = vmatpush1.msra.mxu0 0.0
    %948 = vmatprep.subr.mxu0 0.0
    %949 = vmatpush1.msra.mxu0 0.0
    %950 = vmatprep.subr.mxu0 0.0
    %951 = vmatpush1.msra.mxu0 0.0
    %952 = vmatprep.subr.mxu0 0.0
    %953 = vmatpush1.msra.mxu0 0.0
    %954 = vmatprep.subr.mxu0 0.0
    %955 = vmatpush1.msra.mxu0 0.0
    %956 = vmatprep.subr.mxu0 0.0
    %957 = vmatpush1.msra.mxu0 0.0
    %958 = vmatprep.subr.mxu0 0.0
    %959 = vmatpush1.msra.mxu0 0.0
    %960 = vmatprep.subr.mxu0 0.0
    %961 = vmatpush1.msra.mxu0 0.0
    %962 = vmatprep.subr.mxu0 0.0
    %963 = vmatpush1.msra.mxu0 0.0
    %964 = vmatprep.subr.mxu0 0.0
    %965 = vmatpush1.msra.mxu0 0.0
    %966 = vmatprep.subr.mxu0 0.0
    %967 = vmatpush1.msra.mxu0 0.0
    %968 = vmatprep.subr.mxu0 0.0
    %969 = vmatpush1.msra.mxu0 0.0
    %970 = vmatprep.subr.mxu0 0.0
    %971 = vmatpush1.msra.mxu0 0.0
    %972 = vmatprep.subr.mxu0 0.0
    %973 = vmatpush1.msra.mxu0 0.0
    %974 = vmatprep.subr.mxu0 0.0
    %975 = vmatpush1.msra.mxu0 0.0
    %976 = vmatprep.subr.mxu0 0.0
    %977 = vmatpush1.msra.mxu0 0.0
    %978 = vmatprep.subr.mxu0 0.0
    %979 = vmatpush1.msra.mxu0 0.0
    %980 = vmatprep.subr.mxu0 0.0
    %981 = vmatpush1.msra.mxu0 0.0
    %982 = vmatprep.subr.mxu0 0.0
    %983 = vmatpush1.msra.mxu0 0.0
    %984 = vmatprep.subr.mxu0 0.0
    %985 = vmatpush1.msra.mxu0 0.0
    %986 = vmatprep.subr.mxu0 0.0
    %987 = vmatpush1.msra.mxu0 0.0
    %988 = vmatprep.subr.mxu0 0.0
    %989 = vmatpush1.msra.mxu0 0.0
    %990 = vmatprep.subr.mxu0 0.0
    %991 = vmatpush1.msra.mxu0 0.0
    %992 = vmatprep.subr.mxu0 0.0
    %993 = vmatpush1.msra.mxu0 0.0
    %994 = vmatprep.mubr.f32.mxu0 0.0
    %995 = vmatmul.mubr.f32.gmra.mrb[0].mxu0 %v928
    %v996 = vpop.f32.mrb[0].mxu0
    %v997 = vadd.f32 0.0, %v996
    %v998 = vpop.f32.mrb[0].mxu0
    %999 = vdwg.mxu0
    %v1000 = vadd.f32 %v927, %v997
    %v1001 = vxor.u32 %v1000, 2147483648
    %v1002 = vmul.f32 %v1001, 1.442695
    %v1003 = vpow.pop %v1002
    %v1004 = vadd.f32 %v1003, 1.0
    %v1005 = vrcp.pop %v1004
    %v1006 = vmul.f32 1.0, %v1005
    %v1007 = vtanh.pop %v1000
    %v1008 = vmul.f32 %v1006, %v915
    %1010 = vrot.lane.b32.xlu0 %v1007, 64
    %v1011 = vpop.permute.xlu0 %1010
    %v1013 = vmul.f32 %v1006, %v1011
    %1015 = vrot.lane.b32.xlu0 %v1013, 32
    %v1016 = vpop.permute.xlu0 %1015
    %v1018 = vadd.f32 %v1008, %v1016
    %v1019 = vtanh.pop %v1018
    %1021 = vrot.lane.b32.xlu0 %v1019, 64
    %v1022 = vpop.permute.xlu0 %1021
    %v1024 = vmul.f32 %v1006, %v1022
    %1026 = vrot.lane.b32.xlu0 %v1024, 32
    %v1027 = vpop.permute.xlu0 %1026
    %1029 = vst.msk [vmem:[%s7 + $0x38] sm:$0xff] %vm205, %v1027
    %1030 = vst.msk [vmem:[#allocation6] sm:$0xff] %vm205, %v1027
    %1032 = vrot.lane.b32.xlu0 %v1018, 96
    %v1033 = vpop.permute.xlu0 %1032
    %1035 = vst.msk [vmem:[#allocation7] sm:$0xff] %vm205, %v1033
    %v1036 = vld [vmem:[%s4] sm:$0xff]
    %v1037 = vld [vmem:[%s4 + $0x8] sm:$0xff]
    %v1038 = vld [vmem:[%s4 + $0x10] sm:$0xff]
    %v1039 = vld [vmem:[%s4 + $0x18] sm:$0xff]
    %v1040 = vld [vmem:[%s5] sm:$0xff]
    %v1041 = vld [vmem:[%s5 + $0x8] sm:$0xff]
    %v1042 = vld [vmem:[%s5 + $0x10] sm:$0xff]
    %v1043 = vld [vmem:[%s5 + $0x18] sm:$0xff]
    %v1044 = vld [vmem:[%s6] sm:$0x1]
    %v1045 = vld [vmem:[%s7] sm:$0xff]
    %v1046 = vld [vmem:[%s7 + $0x8] sm:$0xff]
    %v1047 = vld [vmem:[%s7 + $0x10] sm:$0xff]
    %v1048 = vld [vmem:[%s7 + $0x18] sm:$0xff]
    %v1049 = vld [vmem:[%s7 + $0x20] sm:$0xff]
    %v1050 = vld [vmem:[%s7 + $0x28] sm:$0xff]
    %v1051 = vld [vmem:[%s7 + $0x30] sm:$0xff]
    %v1052 = vld [vmem:[%s7 + $0x38] sm:$0xff]
    %v1054 = vlaneseq
    %v1055 = vshrl.u32 %v1054, 7
    %v1056 = vsub.s32 0, %v1055
    %v1057 = vrot.slane %v1044, %v1056
    %v1060 = vsel %vm205, %v1045, 0
    %v1063 = vsel %vm205, %v1046, 0
    %v1066 = vsel %vm205, %v1047, 0
    %v1069 = vsel %vm205, %v1048, 0
    %v1072 = vsel %vm205, %v1049, 0
    %v1075 = vsel %vm205, %v1050, 0
    %v1078 = vsel %vm205, %v1051, 0
    %v1081 = vsel %vm205, %v1052, 0
    %1083 = vmatprep.subr.mxu0 0.0
    %1084 = vmatpush1.msra.mxu0 %v1036
    %1085 = vmatprep.subr.mxu0 0.0
    %1086 = vmatpush1.msra.mxu0 %v1037
    %1087 = vmatprep.subr.mxu0 0.0
    %1088 = vmatpush1.msra.mxu0 %v1038
    %1089 = vmatprep.subr.mxu0 0.0
    %1090 = vmatpush1.msra.mxu0 %v1039
    %1091 = vmatprep.subr.mxu0 0.0
    %1092 = vmatpush1.msra.mxu0 0.0
    %1093 = vmatprep.subr.mxu0 0.0
    %1094 = vmatpush1.msra.mxu0 0.0
    %1095 = vmatprep.subr.mxu0 0.0
    %1096 = vmatpush1.msra.mxu0 0.0
    %1097 = vmatprep.subr.mxu0 0.0
    %1098 = vmatpush1.msra.mxu0 0.0
    %1099 = vmatprep.subr.mxu0 0.0
    %1100 = vmatpush1.msra.mxu0 0.0
    %1101 = vmatprep.subr.mxu0 0.0
    %1102 = vmatpush1.msra.mxu0 0.0
    %1103 = vmatprep.subr.mxu0 0.0
    %1104 = vmatpush1.msra.mxu0 0.0
    %1105 = vmatprep.subr.mxu0 0.0
    %1106 = vmatpush1.msra.mxu0 0.0
    %1107 = vmatprep.subr.mxu0 0.0
    %1108 = vmatpush1.msra.mxu0 0.0
    %1109 = vmatprep.subr.mxu0 0.0
    %1110 = vmatpush1.msra.mxu0 0.0
    %1111 = vmatprep.subr.mxu0 0.0
    %1112 = vmatpush1.msra.mxu0 0.0
    %1113 = vmatprep.subr.mxu0 0.0
    %1114 = vmatpush1.msra.mxu0 0.0
    %1115 = vmatprep.subr.mxu0 0.0
    %1116 = vmatpush1.msra.mxu0 0.0
    %1117 = vmatprep.subr.mxu0 0.0
    %1118 = vmatpush1.msra.mxu0 0.0
    %1119 = vmatprep.subr.mxu0 0.0
    %1120 = vmatpush1.msra.mxu0 0.0
    %1121 = vmatprep.subr.mxu0 0.0
    %1122 = vmatpush1.msra.mxu0 0.0
    %1123 = vmatprep.subr.mxu0 0.0
    %1124 = vmatpush1.msra.mxu0 0.0
    %1125 = vmatprep.subr.mxu0 0.0
    %1126 = vmatpush1.msra.mxu0 0.0
    %1127 = vmatprep.subr.mxu0 0.0
    %1128 = vmatpush1.msra.mxu0 0.0
    %1129 = vmatprep.subr.mxu0 0.0
    %1130 = vmatpush1.msra.mxu0 0.0
    %1131 = vmatprep.subr.mxu0 0.0
    %1132 = vmatpush1.msra.mxu0 0.0
    %1133 = vmatprep.subr.mxu0 0.0
    %1134 = vmatpush1.msra.mxu0 0.0
    %1135 = vmatprep.subr.mxu0 0.0
    %1136 = vmatpush1.msra.mxu0 0.0
    %1137 = vmatprep.subr.mxu0 0.0
    %1138 = vmatpush1.msra.mxu0 0.0
    %1139 = vmatprep.subr.mxu0 0.0
    %1140 = vmatpush1.msra.mxu0 0.0
    %1141 = vmatprep.subr.mxu0 0.0
    %1142 = vmatpush1.msra.mxu0 0.0
    %1143 = vmatprep.subr.mxu0 0.0
    %1144 = vmatpush1.msra.mxu0 0.0
    %1145 = vmatprep.subr.mxu0 0.0
    %1146 = vmatpush1.msra.mxu0 0.0
    %1147 = vmatprep.mubr.f32.mxu0 0.0
    %1148 = vmatmul.mubr.f32.gmra.mrb[0].mxu0 %v1060
    %v1149 = vpop.f32.mrb[0].mxu0
    %v1150 = vadd.f32 %v1057, %v1149
    %v1151 = vpop.f32.mrb[0].mxu0
    %1152 = vmatprep.mubr.f32.mxu0 0.0
    %1153 = vmatmul.mubr.f32.gmra.mrb[0].mxu0 %v1063
    %v1154 = vpop.f32.mrb[0].mxu0
    %v1155 = vadd.f32 %v1057, %v1154
    %v1156 = vpop.f32.mrb[0].mxu0
    %1157 = vmatprep.mubr.f32.mxu0 0.0
    %1158 = vmatmul.mubr.f32.gmra.mrb[0].mxu0 %v1066
    %v1159 = vpop.f32.mrb[0].mxu0
    %v1160 = vadd.f32 %v1057, %v1159
    %v1161 = vpop.f32.mrb[0].mxu0
    %1162 = vmatprep.mubr.f32.mxu0 0.0
    %1163 = vmatmul.mubr.f32.gmra.mrb[0].mxu0 %v1069
    %v1164 = vpop.f32.mrb[0].mxu0
    %v1165 = vadd.f32 %v1057, %v1164
    %v1166 = vpop.f32.mrb[0].mxu0
    %1167 = vmatprep.mubr.f32.mxu0 0.0
    %1168 = vmatmul.mubr.f32.gmra.mrb[0].mxu0 %v1072
    %v1169 = vpop.f32.mrb[0].mxu0
    %v1170 = vadd.f32 %v1057, %v1169
    %v1171 = vpop.f32.mrb[0].mxu0
    %1172 = vmatprep.mubr.f32.mxu0 0.0
    %1173 = vmatmul.mubr.f32.gmra.mrb[0].mxu0 %v1075
    %v1174 = vpop.f32.mrb[0].mxu0
    %v1175 = vadd.f32 %v1057, %v1174
    %v1176 = vpop.f32.mrb[0].mxu0
    %1177 = vmatprep.mubr.f32.mxu0 0.0
    %1178 = vmatmul.mubr.f32.gmra.mrb[0].mxu0 %v1078
    %v1179 = vpop.f32.mrb[0].mxu0
    %v1180 = vadd.f32 %v1057, %v1179
    %v1181 = vpop.f32.mrb[0].mxu0
    %1182 = vmatprep.mubr.f32.mxu0 0.0
    %1183 = vmatmul.mubr.f32.gmra.mrb[0].mxu0 %v1081
    %v1184 = vpop.f32.mrb[0].mxu0
    %v1185 = vadd.f32 %v1057, %v1184
    %v1186 = vpop.f32.mrb[0].mxu0
    %1187 = vdwg.mxu0
    %1188 = vst [vmem:[#allocation2] sm:$0xff] %v1150
    %1189 = vst [vmem:[#allocation2 + $0x8] sm:$0xff] %v1155
    %1190 = vst [vmem:[#allocation2 + $0x10] sm:$0xff] %v1160
    %1191 = vst [vmem:[#allocation2 + $0x18] sm:$0xff] %v1165
    %1192 = vst [vmem:[#allocation2 + $0x20] sm:$0xff] %v1170
    %1193 = vst [vmem:[#allocation2 + $0x28] sm:$0xff] %v1175
    %1194 = vst [vmem:[#allocation2 + $0x30] sm:$0xff] %v1180
    %1195 = vst [vmem:[#allocation2 + $0x38] sm:$0xff] %v1185
    %v1196 = vld [vmem:[#allocation2] sm:$0xff]
    %1197 = vmatprep.subr.mxu0 0.0
    %1198 = vmatpush1.msra.mxu0 %v1040
    %1199 = vmatprep.subr.mxu0 0.0
    %1200 = vmatpush1.msra.mxu0 %v1041
    %1201 = vmatprep.subr.mxu0 0.0
    %1202 = vmatpush1.msra.mxu0 %v1042
    %1203 = vmatprep.subr.mxu0 0.0
    %1204 = vmatpush1.msra.mxu0 %v1043
    %1205 = vmatprep.subr.mxu0 0.0
    %1206 = vmatpush1.msra.mxu0 0.0
    %1207 = vmatprep.subr.mxu0 0.0
    %1208 = vmatpush1.msra.mxu0 0.0
    %1209 = vmatprep.subr.mxu0 0.0
    %1210 = vmatpush1.msra.mxu0 0.0
    %1211 = vmatprep.subr.mxu0 0.0
    %1212 = vmatpush1.msra.mxu0 0.0
    %1213 = vmatprep.subr.mxu0 0.0
    %1214 = vmatpush1.msra.mxu0 0.0
    %1215 = vmatprep.subr.mxu0 0.0
    %1216 = vmatpush1.msra.mxu0 0.0
    %1217 = vmatprep.subr.mxu0 0.0
    %1218 = vmatpush1.msra.mxu0 0.0
    %1219 = vmatprep.subr.mxu0 0.0
    %1220 = vmatpush1.msra.mxu0 0.0
    %1221 = vmatprep.subr.mxu0 0.0
    %1222 = vmatpush1.msra.mxu0 0.0
    %1223 = vmatprep.subr.mxu0 0.0
    %1224 = vmatpush1.msra.mxu0 0.0
    %1225 = vmatprep.subr.mxu0 0.0
    %1226 = vmatpush1.msra.mxu0 0.0
    %1227 = vmatprep.subr.mxu0 0.0
    %1228 = vmatpush1.msra.mxu0 0.0
    %1229 = vmatprep.subr.mxu0 0.0
    %1230 = vmatpush1.msra.mxu0 0.0
    %1231 = vmatprep.subr.mxu0 0.0
    %1232 = vmatpush1.msra.mxu0 0.0
    %1233 = vmatprep.subr.mxu0 0.0
    %1234 = vmatpush1.msra.mxu0 0.0
    %1235 = vmatprep.subr.mxu0 0.0
    %1236 = vmatpush1.msra.mxu0 0.0
    %1237 = vmatprep.subr.mxu0 0.0
    %1238 = vmatpush1.msra.mxu0 0.0
    %1239 = vmatprep.subr.mxu0 0.0
    %1240 = vmatpush1.msra.mxu0 0.0
    %1241 = vmatprep.subr.mxu0 0.0
    %1242 = vmatpush1.msra.mxu0 0.0
    %1243 = vmatprep.subr.mxu0 0.0
    %1244 = vmatpush1.msra.mxu0 0.0
    %1245 = vmatprep.subr.mxu0 0.0
    %1246 = vmatpush1.msra.mxu0 0.0
    %1247 = vmatprep.subr.mxu0 0.0
    %1248 = vmatpush1.msra.mxu0 0.0
    %1249 = vmatprep.subr.mxu0 0.0
    %1250 = vmatpush1.msra.mxu0 0.0
    %1251 = vmatprep.subr.mxu0 0.0
    %1252 = vmatpush1.msra.mxu0 0.0
    %1253 = vmatprep.subr.mxu0 0.0
    %1254 = vmatpush1.msra.mxu0 0.0
    %1255 = vmatprep.subr.mxu0 0.0
    %1256 = vmatpush1.msra.mxu0 0.0
    %1257 = vmatprep.subr.mxu0 0.0
    %1258 = vmatpush1.msra.mxu0 0.0
    %1259 = vmatprep.subr.mxu0 0.0
    %1260 = vmatpush1.msra.mxu0 0.0
    %1261 = vmatprep.mubr.f32.mxu0 0.0
    %1262 = vmatmul.mubr.f32.gmra.mrb[0].mxu0 %v207
    %v1263 = vpop.f32.mrb[0].mxu0
    %v1264 = vadd.f32 0.0, %v1263
    %v1265 = vpop.f32.mrb[0].mxu0
    %1266 = vdwg.mxu0
    %v1267 = vadd.f32 %v1196, %v1264
    %v1268 = vxor.u32 %v1267, 2147483648
    %v1269 = vmul.f32 %v1268, 1.442695
    %v1270 = vpow.pop %v1269
    %v1271 = vadd.f32 %v1270, 1.0
    %v1272 = vrcp.pop %v1271
    %v1273 = vmul.f32 1.0, %v1272
    %v1274 = vtanh.pop %v1267
    %v1275 = vmul.f32 %v1273, 0.0
    %1277 = vrot.lane.b32.xlu0 %v1274, 64
    %v1278 = vpop.permute.xlu0 %1277
    %v1280 = vmul.f32 %v1273, %v1278
    %1282 = vrot.lane.b32.xlu0 %v1280, 32
    %v1283 = vpop.permute.xlu0 %1282
    %v1285 = vadd.f32 %v1275, %v1283
    %v1286 = vtanh.pop %v1285
    %1288 = vrot.lane.b32.xlu0 %v1286, 64
    %v1289 = vpop.permute.xlu0 %1288
    %v1291 = vmul.f32 %v1273, %v1289
    %1293 = vrot.lane.b32.xlu0 %v1291, 32
    %v1294 = vpop.permute.xlu0 %1293
    %1296 = vst.msk [vmem:[%s7] sm:$0xff] %vm205, %v1294
    %v1297 = vld [vmem:[#allocation2 + $0x8] sm:$0xff]
    %v1298 = vsel %vm205, %v1294, 0
    %1300 = vmatprep.subr.mxu0 0.0
    %1301 = vmatpush1.msra.mxu0 %v1040
    %1302 = vmatprep.subr.mxu0 0.0
    %1303 = vmatpush1.msra.mxu0 %v1041
    %1304 = vmatprep.subr.mxu0 0.0
    %1305 = vmatpush1.msra.mxu0 %v1042
    %1306 = vmatprep.subr.mxu0 0.0
    %1307 = vmatpush1.msra.mxu0 %v1043
    %1308 = vmatprep.subr.mxu0 0.0
    %1309 = vmatpush1.msra.mxu0 0.0
    %1310 = vmatprep.subr.mxu0 0.0
    %1311 = vmatpush1.msra.mxu0 0.0
    %1312 = vmatprep.subr.mxu0 0.0
    %1313 = vmatpush1.msra.mxu0 0.0
    %1314 = vmatprep.subr.mxu0 0.0
    %1315 = vmatpush1.msra.mxu0 0.0
    %1316 = vmatprep.subr.mxu0 0.0
    %1317 = vmatpush1.msra.mxu0 0.0
    %1318 = vmatprep.subr.mxu0 0.0
    %1319 = vmatpush1.msra.mxu0 0.0
    %1320 = vmatprep.subr.mxu0 0.0
    %1321 = vmatpush1.msra.mxu0 0.0
    %1322 = vmatprep.subr.mxu0 0.0
    %1323 = vmatpush1.msra.mxu0 0.0
    %1324 = vmatprep.subr.mxu0 0.0
    %1325 = vmatpush1.msra.mxu0 0.0
    %1326 = vmatprep.subr.mxu0 0.0
    %1327 = vmatpush1.msra.mxu0 0.0
    %1328 = vmatprep.subr.mxu0 0.0
    %1329 = vmatpush1.msra.mxu0 0.0
    %1330 = vmatprep.subr.mxu0 0.0
    %1331 = vmatpush1.msra.mxu0 0.0
    %1332 = vmatprep.subr.mxu0 0.0
    %1333 = vmatpush1.msra.mxu0 0.0
    %1334 = vmatprep.subr.mxu0 0.0
    %1335 = vmatpush1.msra.mxu0 0.0
    %1336 = vmatprep.subr.mxu0 0.0
    %1337 = vmatpush1.msra.mxu0 0.0
    %1338 = vmatprep.subr.mxu0 0.0
    %1339 = vmatpush1.msra.mxu0 0.0
    %1340 = vmatprep.subr.mxu0 0.0
    %1341 = vmatpush1.msra.mxu0 0.0
    %1342 = vmatprep.subr.mxu0 0.0
    %1343 = vmatpush1.msra.mxu0 0.0
    %1344 = vmatprep.subr.mxu0 0.0
    %1345 = vmatpush1.msra.mxu0 0.0
    %1346 = vmatprep.subr.mxu0 0.0
    %1347 = vmatpush1.msra.mxu0 0.0
    %1348 = vmatprep.subr.mxu0 0.0
    %1349 = vmatpush1.msra.mxu0 0.0
    %1350 = vmatprep.subr.mxu0 0.0
    %1351 = vmatpush1.msra.mxu0 0.0
    %1352 = vmatprep.subr.mxu0 0.0
    %1353 = vmatpush1.msra.mxu0 0.0
    %1354 = vmatprep.subr.mxu0 0.0
    %1355 = vmatpush1.msra.mxu0 0.0
    %1356 = vmatprep.subr.mxu0 0.0
    %1357 = vmatpush1.msra.mxu0 0.0
    %1358 = vmatprep.subr.mxu0 0.0
    %1359 = vmatpush1.msra.mxu0 0.0
    %1360 = vmatprep.subr.mxu0 0.0
    %1361 = vmatpush1.msra.mxu0 0.0
    %1362 = vmatprep.subr.mxu0 0.0
    %1363 = vmatpush1.msra.mxu0 0.0
    %1364 = vmatprep.mubr.f32.mxu0 0.0
    %1365 = vmatmul.mubr.f32.gmra.mrb[0].mxu0 %v1298
    %v1366 = vpop.f32.mrb[0].mxu0
    %v1367 = vadd.f32 0.0, %v1366
    %v1368 = vpop.f32.mrb[0].mxu0
    %1369 = vdwg.mxu0
    %v1370 = vadd.f32 %v1297, %v1367
    %v1371 = vxor.u32 %v1370, 2147483648
    %v1372 = vmul.f32 %v1371, 1.442695
    %v1373 = vpow.pop %v1372
    %v1374 = vadd.f32 %v1373, 1.0
    %v1375 = vrcp.pop %v1374
    %v1376 = vmul.f32 1.0, %v1375
    %v1377 = vtanh.pop %v1370
    %v1378 = vmul.f32 %v1376, %v1285
    %1380 = vrot.lane.b32.xlu0 %v1377, 64
    %v1381 = vpop.permute.xlu0 %1380
    %v1383 = vmul.f32 %v1376, %v1381
    %1385 = vrot.lane.b32.xlu0 %v1383, 32
    %v1386 = vpop.permute.xlu0 %1385
    %v1388 = vadd.f32 %v1378, %v1386
    %v1389 = vtanh.pop %v1388
    %1391 = vrot.lane.b32.xlu0 %v1389, 64
    %v1392 = vpop.permute.xlu0 %1391
    %v1394 = vmul.f32 %v1376, %v1392
    %1396 = vrot.lane.b32.xlu0 %v1394, 32
    %v1397 = vpop.permute.xlu0 %1396
    %1399 = vst.msk [vmem:[%s7 + $0x8] sm:$0xff] %vm205, %v1397
    %v1400 = vld [vmem:[#allocation2 + $0x10] sm:$0xff]
    %v1401 = vsel %vm205, %v1397, 0
    %1403 = vmatprep.subr.mxu0 0.0
    %1404 = vmatpush1.msra.mxu0 %v1040
    %1405 = vmatprep.subr.mxu0 0.0
    %1406 = vmatpush1.msra.mxu0 %v1041
    %1407 = vmatprep.subr.mxu0 0.0
    %1408 = vmatpush1.msra.mxu0 %v1042
    %1409 = vmatprep.subr.mxu0 0.0
    %1410 = vmatpush1.msra.mxu0 %v1043
    %1411 = vmatprep.subr.mxu0 0.0
    %1412 = vmatpush1.msra.mxu0 0.0
    %1413 = vmatprep.subr.mxu0 0.0
    %1414 = vmatpush1.msra.mxu0 0.0
    %1415 = vmatprep.subr.mxu0 0.0
    %1416 = vmatpush1.msra.mxu0 0.0
    %1417 = vmatprep.subr.mxu0 0.0
    %1418 = vmatpush1.msra.mxu0 0.0
    %1419 = vmatprep.subr.mxu0 0.0
    %1420 = vmatpush1.msra.mxu0 0.0
    %1421 = vmatprep.subr.mxu0 0.0
    %1422 = vmatpush1.msra.mxu0 0.0
    %1423 = vmatprep.subr.mxu0 0.0
    %1424 = vmatpush1.msra.mxu0 0.0
    %1425 = vmatprep.subr.mxu0 0.0
    %1426 = vmatpush1.msra.mxu0 0.0
    %1427 = vmatprep.subr.mxu0 0.0
    %1428 = vmatpush1.msra.mxu0 0.0
    %1429 = vmatprep.subr.mxu0 0.0
    %1430 = vmatpush1.msra.mxu0 0.0
    %1431 = vmatprep.subr.mxu0 0.0
    %1432 = vmatpush1.msra.mxu0 0.0
    %1433 = vmatprep.subr.mxu0 0.0
    %1434 = vmatpush1.msra.mxu0 0.0
    %1435 = vmatprep.subr.mxu0 0.0
    %1436 = vmatpush1.msra.mxu0 0.0
    %1437 = vmatprep.subr.mxu0 0.0
    %1438 = vmatpush1.msra.mxu0 0.0
    %1439 = vmatprep.subr.mxu0 0.0
    %1440 = vmatpush1.msra.mxu0 0.0
    %1441 = vmatprep.subr.mxu0 0.0
    %1442 = vmatpush1.msra.mxu0 0.0
    %1443 = vmatprep.subr.mxu0 0.0
    %1444 = vmatpush1.msra.mxu0 0.0
    %1445 = vmatprep.subr.mxu0 0.0
    %1446 = vmatpush1.msra.mxu0 0.0
    %1447 = vmatprep.subr.mxu0 0.0
    %1448 = vmatpush1.msra.mxu0 0.0
    %1449 = vmatprep.subr.mxu0 0.0
    %1450 = vmatpush1.msra.mxu0 0.0
    %1451 = vmatprep.subr.mxu0 0.0
    %1452 = vmatpush1.msra.mxu0 0.0
    %1453 = vmatprep.subr.mxu0 0.0
    %1454 = vmatpush1.msra.mxu0 0.0
    %1455 = vmatprep.subr.mxu0 0.0
    %1456 = vmatpush1.msra.mxu0 0.0
    %1457 = vmatprep.subr.mxu0 0.0
    %1458 = vmatpush1.msra.mxu0 0.0
    %1459 = vmatprep.subr.mxu0 0.0
    %1460 = vmatpush1.msra.mxu0 0.0
    %1461 = vmatprep.subr.mxu0 0.0
    %1462 = vmatpush1.msra.mxu0 0.0
    %1463 = vmatprep.subr.mxu0 0.0
    %1464 = vmatpush1.msra.mxu0 0.0
    %1465 = vmatprep.subr.mxu0 0.0
    %1466 = vmatpush1.msra.mxu0 0.0
    %1467 = vmatprep.mubr.f32.mxu0 0.0
    %1468 = vmatmul.mubr.f32.gmra.mrb[0].mxu0 %v1401
    %v1469 = vpop.f32.mrb[0].mxu0
    %v1470 = vadd.f32 0.0, %v1469
    %v1471 = vpop.f32.mrb[0].mxu0
    %1472 = vdwg.mxu0
    %v1473 = vadd.f32 %v1400, %v1470
    %v1474 = vxor.u32 %v1473, 2147483648
    %v1475 = vmul.f32 %v1474, 1.442695
    %v1476 = vpow.pop %v1475
    %v1477 = vadd.f32 %v1476, 1.0
    %v1478 = vrcp.pop %v1477
    %v1479 = vmul.f32 1.0, %v1478
    %v1480 = vtanh.pop %v1473
    %v1481 = vmul.f32 %v1479, %v1388
    %1483 = vrot.lane.b32.xlu0 %v1480, 64
    %v1484 = vpop.permute.xlu0 %1483
    %v1486 = vmul.f32 %v1479, %v1484
    %1488 = vrot.lane.b32.xlu0 %v1486, 32
    %v1489 = vpop.permute.xlu0 %1488
    %v1491 = vadd.f32 %v1481, %v1489
    %v1492 = vtanh.pop %v1491
    %1494 = vrot.lane.b32.xlu0 %v1492, 64
    %v1495 = vpop.permute.xlu0 %1494
    %v1497 = vmul.f32 %v1479, %v1495
    %1499 = vrot.lane.b32.xlu0 %v1497, 32
    %v1500 = vpop.permute.xlu0 %1499
    %1502 = vst.msk [vmem:[%s7 + $0x10] sm:$0xff] %vm205, %v1500
    %v1503 = vld [vmem:[#allocation2 + $0x18] sm:$0xff]
    %v1504 = vsel %vm205, %v1500, 0
    %1506 = vmatprep.subr.mxu0 0.0
    %1507 = vmatpush1.msra.mxu0 %v1040
    %1508 = vmatprep.subr.mxu0 0.0
    %1509 = vmatpush1.msra.mxu0 %v1041
    %1510 = vmatprep.subr.mxu0 0.0
    %1511 = vmatpush1.msra.mxu0 %v1042
    %1512 = vmatprep.subr.mxu0 0.0
    %1513 = vmatpush1.msra.mxu0 %v1043
    %1514 = vmatprep.subr.mxu0 0.0
    %1515 = vmatpush1.msra.mxu0 0.0
    %1516 = vmatprep.subr.mxu0 0.0
    %1517 = vmatpush1.msra.mxu0 0.0
    %1518 = vmatprep.subr.mxu0 0.0
    %1519 = vmatpush1.msra.mxu0 0.0
    %1520 = vmatprep.subr.mxu0 0.0
    %1521 = vmatpush1.msra.mxu0 0.0
    %1522 = vmatprep.subr.mxu0 0.0
    %1523 = vmatpush1.msra.mxu0 0.0
    %1524 = vmatprep.subr.mxu0 0.0
    %1525 = vmatpush1.msra.mxu0 0.0
    %1526 = vmatprep.subr.mxu0 0.0
    %1527 = vmatpush1.msra.mxu0 0.0
    %1528 = vmatprep.subr.mxu0 0.0
    %1529 = vmatpush1.msra.mxu0 0.0
    %1530 = vmatprep.subr.mxu0 0.0
    %1531 = vmatpush1.msra.mxu0 0.0
    %1532 = vmatprep.subr.mxu0 0.0
    %1533 = vmatpush1.msra.mxu0 0.0
    %1534 = vmatprep.subr.mxu0 0.0
    %1535 = vmatpush1.msra.mxu0 0.0
    %1536 = vmatprep.subr.mxu0 0.0
    %1537 = vmatpush1.msra.mxu0 0.0
    %1538 = vmatprep.subr.mxu0 0.0
    %1539 = vmatpush1.msra.mxu0 0.0
    %1540 = vmatprep.subr.mxu0 0.0
    %1541 = vmatpush1.msra.mxu0 0.0
    %1542 = vmatprep.subr.mxu0 0.0
    %1543 = vmatpush1.msra.mxu0 0.0
    %1544 = vmatprep.subr.mxu0 0.0
    %1545 = vmatpush1.msra.mxu0 0.0
    %1546 = vmatprep.subr.mxu0 0.0
    %1547 = vmatpush1.msra.mxu0 0.0
    %1548 = vmatprep.subr.mxu0 0.0
    %1549 = vmatpush1.msra.mxu0 0.0
    %1550 = vmatprep.subr.mxu0 0.0
    %1551 = vmatpush1.msra.mxu0 0.0
    %1552 = vmatprep.subr.mxu0 0.0
    %1553 = vmatpush1.msra.mxu0 0.0
    %1554 = vmatprep.subr.mxu0 0.0
    %1555 = vmatpush1.msra.mxu0 0.0
    %1556 = vmatprep.subr.mxu0 0.0
    %1557 = vmatpush1.msra.mxu0 0.0
    %1558 = vmatprep.subr.mxu0 0.0
    %1559 = vmatpush1.msra.mxu0 0.0
    %1560 = vmatprep.subr.mxu0 0.0
    %1561 = vmatpush1.msra.mxu0 0.0
    %1562 = vmatprep.subr.mxu0 0.0
    %1563 = vmatpush1.msra.mxu0 0.0
    %1564 = vmatprep.subr.mxu0 0.0
    %1565 = vmatpush1.msra.mxu0 0.0
    %1566 = vmatprep.subr.mxu0 0.0
    %1567 = vmatpush1.msra.mxu0 0.0
    %1568 = vmatprep.subr.mxu0 0.0
    %1569 = vmatpush1.msra.mxu0 0.0
    %1570 = vmatprep.mubr.f32.mxu0 0.0
    %1571 = vmatmul.mubr.f32.gmra.mrb[0].mxu0 %v1504
    %v1572 = vpop.f32.mrb[0].mxu0
    %v1573 = vadd.f32 0.0, %v1572
    %v1574 = vpop.f32.mrb[0].mxu0
    %1575 = vdwg.mxu0
    %v1576 = vadd.f32 %v1503, %v1573
    %v1577 = vxor.u32 %v1576, 2147483648
    %v1578 = vmul.f32 %v1577, 1.442695
    %v1579 = vpow.pop %v1578
    %v1580 = vadd.f32 %v1579, 1.0
    %v1581 = vrcp.pop %v1580
    %v1582 = vmul.f32 1.0, %v1581
    %v1583 = vtanh.pop %v1576
    %v1584 = vmul.f32 %v1582, %v1491
    %1586 = vrot.lane.b32.xlu0 %v1583, 64
    %v1587 = vpop.permute.xlu0 %1586
    %v1589 = vmul.f32 %v1582, %v1587
    %1591 = vrot.lane.b32.xlu0 %v1589, 32
    %v1592 = vpop.permute.xlu0 %1591
    %v1594 = vadd.f32 %v1584, %v1592
    %v1595 = vtanh.pop %v1594
    %1597 = vrot.lane.b32.xlu0 %v1595, 64
    %v1598 = vpop.permute.xlu0 %1597
    %v1600 = vmul.f32 %v1582, %v1598
    %1602 = vrot.lane.b32.xlu0 %v1600, 32
    %v1603 = vpop.permute.xlu0 %1602
    %1605 = vst.msk [vmem:[%s7 + $0x18] sm:$0xff] %vm205, %v1603
    %v1606 = vld [vmem:[#allocation2 + $0x20] sm:$0xff]
    %v1607 = vsel %vm205, %v1603, 0
    %1609 = vmatprep.subr.mxu0 0.0
    %1610 = vmatpush1.msra.mxu0 %v1040
    %1611 = vmatprep.subr.mxu0 0.0
    %1612 = vmatpush1.msra.mxu0 %v1041
    %1613 = vmatprep.subr.mxu0 0.0
    %1614 = vmatpush1.msra.mxu0 %v1042
    %1615 = vmatprep.subr.mxu0 0.0
    %1616 = vmatpush1.msra.mxu0 %v1043
    %1617 = vmatprep.subr.mxu0 0.0
    %1618 = vmatpush1.msra.mxu0 0.0
    %1619 = vmatprep.subr.mxu0 0.0
    %1620 = vmatpush1.msra.mxu0 0.0
    %1621 = vmatprep.subr.mxu0 0.0
    %1622 = vmatpush1.msra.mxu0 0.0
    %1623 = vmatprep.subr.mxu0 0.0
    %1624 = vmatpush1.msra.mxu0 0.0
    %1625 = vmatprep.subr.mxu0 0.0
    %1626 = vmatpush1.msra.mxu0 0.0
    %1627 = vmatprep.subr.mxu0 0.0
    %1628 = vmatpush1.msra.mxu0 0.0
    %1629 = vmatprep.subr.mxu0 0.0
    %1630 = vmatpush1.msra.mxu0 0.0
    %1631 = vmatprep.subr.mxu0 0.0
    %1632 = vmatpush1.msra.mxu0 0.0
    %1633 = vmatprep.subr.mxu0 0.0
    %1634 = vmatpush1.msra.mxu0 0.0
    %1635 = vmatprep.subr.mxu0 0.0
    %1636 = vmatpush1.msra.mxu0 0.0
    %1637 = vmatprep.subr.mxu0 0.0
    %1638 = vmatpush1.msra.mxu0 0.0
    %1639 = vmatprep.subr.mxu0 0.0
    %1640 = vmatpush1.msra.mxu0 0.0
    %1641 = vmatprep.subr.mxu0 0.0
    %1642 = vmatpush1.msra.mxu0 0.0
    %1643 = vmatprep.subr.mxu0 0.0
    %1644 = vmatpush1.msra.mxu0 0.0
    %1645 = vmatprep.subr.mxu0 0.0
    %1646 = vmatpush1.msra.mxu0 0.0
    %1647 = vmatprep.subr.mxu0 0.0
    %1648 = vmatpush1.msra.mxu0 0.0
    %1649 = vmatprep.subr.mxu0 0.0
    %1650 = vmatpush1.msra.mxu0 0.0
    %1651 = vmatprep.subr.mxu0 0.0
    %1652 = vmatpush1.msra.mxu0 0.0
    %1653 = vmatprep.subr.mxu0 0.0
    %1654 = vmatpush1.msra.mxu0 0.0
    %1655 = vmatprep.subr.mxu0 0.0
    %1656 = vmatpush1.msra.mxu0 0.0
    %1657 = vmatprep.subr.mxu0 0.0
    %1658 = vmatpush1.msra.mxu0 0.0
    %1659 = vmatprep.subr.mxu0 0.0
    %1660 = vmatpush1.msra.mxu0 0.0
    %1661 = vmatprep.subr.mxu0 0.0
    %1662 = vmatpush1.msra.mxu0 0.0
    %1663 = vmatprep.subr.mxu0 0.0
    %1664 = vmatpush1.msra.mxu0 0.0
    %1665 = vmatprep.subr.mxu0 0.0
    %1666 = vmatpush1.msra.mxu0 0.0
    %1667 = vmatprep.subr.mxu0 0.0
    %1668 = vmatpush1.msra.mxu0 0.0
    %1669 = vmatprep.subr.mxu0 0.0
    %1670 = vmatpush1.msra.mxu0 0.0
    %1671 = vmatprep.subr.mxu0 0.0
    %1672 = vmatpush1.msra.mxu0 0.0
    %1673 = vmatprep.mubr.f32.mxu0 0.0
    %1674 = vmatmul.mubr.f32.gmra.mrb[0].mxu0 %v1607
    %v1675 = vpop.f32.mrb[0].mxu0
    %v1676 = vadd.f32 0.0, %v1675
    %v1677 = vpop.f32.mrb[0].mxu0
    %1678 = vdwg.mxu0
    %v1679 = vadd.f32 %v1606, %v1676
    %v1680 = vxor.u32 %v1679, 2147483648
    %v1681 = vmul.f32 %v1680, 1.442695
    %v1682 = vpow.pop %v1681
    %v1683 = vadd.f32 %v1682, 1.0
    %v1684 = vrcp.pop %v1683
    %v1685 = vmul.f32 1.0, %v1684
    %v1686 = vtanh.pop %v1679
    %v1687 = vmul.f32 %v1685, %v1594
    %1689 = vrot.lane.b32.xlu0 %v1686, 64
    %v1690 = vpop.permute.xlu0 %1689
    %v1692 = vmul.f32 %v1685, %v1690
    %1694 = vrot.lane.b32.xlu0 %v1692, 32
    %v1695 = vpop.permute.xlu0 %1694
    %v1697 = vadd.f32 %v1687, %v1695
    %v1698 = vtanh.pop %v1697
    %1700 = vrot.lane.b32.xlu0 %v1698, 64
    %v1701 = vpop.permute.xlu0 %1700
    %v1703 = vmul.f32 %v1685, %v1701
    %1705 = vrot.lane.b32.xlu0 %v1703, 32
    %v1706 = vpop.permute.xlu0 %1705
    %1708 = vst.msk [vmem:[%s7 + $0x20] sm:$0xff] %vm205, %v1706
    %v1709 = vld [vmem:[#allocation2 + $0x28] sm:$0xff]
    %v1710 = vsel %vm205, %v1706, 0
    %1712 = vmatprep.subr.mxu0 0.0
    %1713 = vmatpush1.msra.mxu0 %v1040
    %1714 = vmatprep.subr.mxu0 0.0
    %1715 = vmatpush1.msra.mxu0 %v1041
    %1716 = vmatprep.subr.mxu0 0.0
    %1717 = vmatpush1.msra.mxu0 %v1042
    %1718 = vmatprep.subr.mxu0 0.0
    %1719 = vmatpush1.msra.mxu0 %v1043
    %1720 = vmatprep.subr.mxu0 0.0
    %1721 = vmatpush1.msra.mxu0 0.0
    %1722 = vmatprep.subr.mxu0 0.0
    %1723 = vmatpush1.msra.mxu0 0.0
    %1724 = vmatprep.subr.mxu0 0.0
    %1725 = vmatpush1.msra.mxu0 0.0
    %1726 = vmatprep.subr.mxu0 0.0
    %1727 = vmatpush1.msra.mxu0 0.0
    %1728 = vmatprep.subr.mxu0 0.0
    %1729 = vmatpush1.msra.mxu0 0.0
    %1730 = vmatprep.subr.mxu0 0.0
    %1731 = vmatpush1.msra.mxu0 0.0
    %1732 = vmatprep.subr.mxu0 0.0
    %1733 = vmatpush1.msra.mxu0 0.0
    %1734 = vmatprep.subr.mxu0 0.0
    %1735 = vmatpush1.msra.mxu0 0.0
    %1736 = vmatprep.subr.mxu0 0.0
    %1737 = vmatpush1.msra.mxu0 0.0
    %1738 = vmatprep.subr.mxu0 0.0
    %1739 = vmatpush1.msra.mxu0 0.0
    %1740 = vmatprep.subr.mxu0 0.0
    %1741 = vmatpush1.msra.mxu0 0.0
    %1742 = vmatprep.subr.mxu0 0.0
    %1743 = vmatpush1.msra.mxu0 0.0
    %1744 = vmatprep.subr.mxu0 0.0
    %1745 = vmatpush1.msra.mxu0 0.0
    %1746 = vmatprep.subr.mxu0 0.0
    %1747 = vmatpush1.msra.mxu0 0.0
    %1748 = vmatprep.subr.mxu0 0.0
    %1749 = vmatpush1.msra.mxu0 0.0
    %1750 = vmatprep.subr.mxu0 0.0
    %1751 = vmatpush1.msra.mxu0 0.0
    %1752 = vmatprep.subr.mxu0 0.0
    %1753 = vmatpush1.msra.mxu0 0.0
    %1754 = vmatprep.subr.mxu0 0.0
    %1755 = vmatpush1.msra.mxu0 0.0
    %1756 = vmatprep.subr.mxu0 0.0
    %1757 = vmatpush1.msra.mxu0 0.0
    %1758 = vmatprep.subr.mxu0 0.0
    %1759 = vmatpush1.msra.mxu0 0.0
    %1760 = vmatprep.subr.mxu0 0.0
    %1761 = vmatpush1.msra.mxu0 0.0
    %1762 = vmatprep.subr.mxu0 0.0
    %1763 = vmatpush1.msra.mxu0 0.0
    %1764 = vmatprep.subr.mxu0 0.0
    %1765 = vmatpush1.msra.mxu0 0.0
    %1766 = vmatprep.subr.mxu0 0.0
    %1767 = vmatpush1.msra.mxu0 0.0
    %1768 = vmatprep.subr.mxu0 0.0
    %1769 = vmatpush1.msra.mxu0 0.0
    %1770 = vmatprep.subr.mxu0 0.0
    %1771 = vmatpush1.msra.mxu0 0.0
    %1772 = vmatprep.subr.mxu0 0.0
    %1773 = vmatpush1.msra.mxu0 0.0
    %1774 = vmatprep.subr.mxu0 0.0
    %1775 = vmatpush1.msra.mxu0 0.0
    %1776 = vmatprep.mubr.f32.mxu0 0.0
    %1777 = vmatmul.mubr.f32.gmra.mrb[0].mxu0 %v1710
    %v1778 = vpop.f32.mrb[0].mxu0
    %v1779 = vadd.f32 0.0, %v1778
    %v1780 = vpop.f32.mrb[0].mxu0
    %1781 = vdwg.mxu0
    %v1782 = vadd.f32 %v1709, %v1779
    %v1783 = vxor.u32 %v1782, 2147483648
    %v1784 = vmul.f32 %v1783, 1.442695
    %v1785 = vpow.pop %v1784
    %v1786 = vadd.f32 %v1785, 1.0
    %v1787 = vrcp.pop %v1786
    %v1788 = vmul.f32 1.0, %v1787
    %v1789 = vtanh.pop %v1782
    %v1790 = vmul.f32 %v1788, %v1697
    %1792 = vrot.lane.b32.xlu0 %v1789, 64
    %v1793 = vpop.permute.xlu0 %1792
    %v1795 = vmul.f32 %v1788, %v1793
    %1797 = vrot.lane.b32.xlu0 %v1795, 32
    %v1798 = vpop.permute.xlu0 %1797
    %v1800 = vadd.f32 %v1790, %v1798
    %v1801 = vtanh.pop %v1800
    %1803 = vrot.lane.b32.xlu0 %v1801, 64
    %v1804 = vpop.permute.xlu0 %1803
    %v1806 = vmul.f32 %v1788, %v1804
    %1808 = vrot.lane.b32.xlu0 %v1806, 32
    %v1809 = vpop.permute.xlu0 %1808
    %1811 = vst.msk [vmem:[%s7 + $0x28] sm:$0xff] %vm205, %v1809
    %v1812 = vld [vmem:[#allocation2 + $0x30] sm:$0xff]
    %v1813 = vsel %vm205, %v1809, 0
    %1815 = vmatprep.subr.mxu0 0.0
    %1816 = vmatpush1.msra.mxu0 %v1040
    %1817 = vmatprep.subr.mxu0 0.0
    %1818 = vmatpush1.msra.mxu0 %v1041
    %1819 = vmatprep.subr.mxu0 0.0
    %1820 = vmatpush1.msra.mxu0 %v1042
    %1821 = vmatprep.subr.mxu0 0.0
    %1822 = vmatpush1.msra.mxu0 %v1043
    %1823 = vmatprep.subr.mxu0 0.0
    %1824 = vmatpush1.msra.mxu0 0.0
    %1825 = vmatprep.subr.mxu0 0.0
    %1826 = vmatpush1.msra.mxu0 0.0
    %1827 = vmatprep.subr.mxu0 0.0
    %1828 = vmatpush1.msra.mxu0 0.0
    %1829 = vmatprep.subr.mxu0 0.0
    %1830 = vmatpush1.msra.mxu0 0.0
    %1831 = vmatprep.subr.mxu0 0.0
    %1832 = vmatpush1.msra.mxu0 0.0
    %1833 = vmatprep.subr.mxu0 0.0
    %1834 = vmatpush1.msra.mxu0 0.0
    %1835 = vmatprep.subr.mxu0 0.0
    %1836 = vmatpush1.msra.mxu0 0.0
    %1837 = vmatprep.subr.mxu0 0.0
    %1838 = vmatpush1.msra.mxu0 0.0
    %1839 = vmatprep.subr.mxu0 0.0
    %1840 = vmatpush1.msra.mxu0 0.0
    %1841 = vmatprep.subr.mxu0 0.0
    %1842 = vmatpush1.msra.mxu0 0.0
    %1843 = vmatprep.subr.mxu0 0.0
    %1844 = vmatpush1.msra.mxu0 0.0
    %1845 = vmatprep.subr.mxu0 0.0
    %1846 = vmatpush1.msra.mxu0 0.0
    %1847 = vmatprep.subr.mxu0 0.0
    %1848 = vmatpush1.msra.mxu0 0.0
    %1849 = vmatprep.subr.mxu0 0.0
    %1850 = vmatpush1.msra.mxu0 0.0
    %1851 = vmatprep.subr.mxu0 0.0
    %1852 = vmatpush1.msra.mxu0 0.0
    %1853 = vmatprep.subr.mxu0 0.0
    %1854 = vmatpush1.msra.mxu0 0.0
    %1855 = vmatprep.subr.mxu0 0.0
    %1856 = vmatpush1.msra.mxu0 0.0
    %1857 = vmatprep.subr.mxu0 0.0
    %1858 = vmatpush1.msra.mxu0 0.0
    %1859 = vmatprep.subr.mxu0 0.0
    %1860 = vmatpush1.msra.mxu0 0.0
    %1861 = vmatprep.subr.mxu0 0.0
    %1862 = vmatpush1.msra.mxu0 0.0
    %1863 = vmatprep.subr.mxu0 0.0
    %1864 = vmatpush1.msra.mxu0 0.0
    %1865 = vmatprep.subr.mxu0 0.0
    %1866 = vmatpush1.msra.mxu0 0.0
    %1867 = vmatprep.subr.mxu0 0.0
    %1868 = vmatpush1.msra.mxu0 0.0
    %1869 = vmatprep.subr.mxu0 0.0
    %1870 = vmatpush1.msra.mxu0 0.0
    %1871 = vmatprep.subr.mxu0 0.0
    %1872 = vmatpush1.msra.mxu0 0.0
    %1873 = vmatprep.subr.mxu0 0.0
    %1874 = vmatpush1.msra.mxu0 0.0
    %1875 = vmatprep.subr.mxu0 0.0
    %1876 = vmatpush1.msra.mxu0 0.0
    %1877 = vmatprep.subr.mxu0 0.0
    %1878 = vmatpush1.msra.mxu0 0.0
    %1879 = vmatprep.mubr.f32.mxu0 0.0
    %1880 = vmatmul.mubr.f32.gmra.mrb[0].mxu0 %v1813
    %v1881 = vpop.f32.mrb[0].mxu0
    %v1882 = vadd.f32 0.0, %v1881
    %v1883 = vpop.f32.mrb[0].mxu0
    %1884 = vdwg.mxu0
    %v1885 = vadd.f32 %v1812, %v1882
    %v1886 = vxor.u32 %v1885, 2147483648
    %v1887 = vmul.f32 %v1886, 1.442695
    %v1888 = vpow.pop %v1887
    %v1889 = vadd.f32 %v1888, 1.0
    %v1890 = vrcp.pop %v1889
    %v1891 = vmul.f32 1.0, %v1890
    %v1892 = vtanh.pop %v1885
    %v1893 = vmul.f32 %v1891, %v1800
    %1895 = vrot.lane.b32.xlu0 %v1892, 64
    %v1896 = vpop.permute.xlu0 %1895
    %v1898 = vmul.f32 %v1891, %v1896
    %1900 = vrot.lane.b32.xlu0 %v1898, 32
    %v1901 = vpop.permute.xlu0 %1900
    %v1903 = vadd.f32 %v1893, %v1901
    %v1904 = vtanh.pop %v1903
    %1906 = vrot.lane.b32.xlu0 %v1904, 64
    %v1907 = vpop.permute.xlu0 %1906
    %v1909 = vmul.f32 %v1891, %v1907
    %1911 = vrot.lane.b32.xlu0 %v1909, 32
    %v1912 = vpop.permute.xlu0 %1911
    %1914 = vst.msk [vmem:[%s7 + $0x30] sm:$0xff] %vm205, %v1912
    %v1915 = vld [vmem:[#allocation2 + $0x38] sm:$0xff]
    %v1916 = vsel %vm205, %v1912, 0
    %1918 = vmatprep.subr.mxu0 0.0
    %1919 = vmatpush1.msra.mxu0 %v1040
    %1920 = vmatprep.subr.mxu0 0.0
    %1921 = vmatpush1.msra.mxu0 %v1041
    %1922 = vmatprep.subr.mxu0 0.0
    %1923 = vmatpush1.msra.mxu0 %v1042
    %1924 = vmatprep.subr.mxu0 0.0
    %1925 = vmatpush1.msra.mxu0 %v1043
    %1926 = vmatprep.subr.mxu0 0.0
    %1927 = vmatpush1.msra.mxu0 0.0
    %1928 = vmatprep.subr.mxu0 0.0
    %1929 = vmatpush1.msra.mxu0 0.0
    %1930 = vmatprep.subr.mxu0 0.0
    %1931 = vmatpush1.msra.mxu0 0.0
    %1932 = vmatprep.subr.mxu0 0.0
    %1933 = vmatpush1.msra.mxu0 0.0
    %1934 = vmatprep.subr.mxu0 0.0
    %1935 = vmatpush1.msra.mxu0 0.0
    %1936 = vmatprep.subr.mxu0 0.0
    %1937 = vmatpush1.msra.mxu0 0.0
    %1938 = vmatprep.subr.mxu0 0.0
    %1939 = vmatpush1.msra.mxu0 0.0
    %1940 = vmatprep.subr.mxu0 0.0
    %1941 = vmatpush1.msra.mxu0 0.0
    %1942 = vmatprep.subr.mxu0 0.0
    %1943 = vmatpush1.msra.mxu0 0.0
    %1944 = vmatprep.subr.mxu0 0.0
    %1945 = vmatpush1.msra.mxu0 0.0
    %1946 = vmatprep.subr.mxu0 0.0
    %1947 = vmatpush1.msra.mxu0 0.0
    %1948 = vmatprep.subr.mxu0 0.0
    %1949 = vmatpush1.msra.mxu0 0.0
    %1950 = vmatprep.subr.mxu0 0.0
    %1951 = vmatpush1.msra.mxu0 0.0
    %1952 = vmatprep.subr.mxu0 0.0
    %1953 = vmatpush1.msra.mxu0 0.0
    %1954 = vmatprep.subr.mxu0 0.0
    %1955 = vmatpush1.msra.mxu0 0.0
    %1956 = vmatprep.subr.mxu0 0.0
    %1957 = vmatpush1.msra.mxu0 0.0
    %1958 = vmatprep.subr.mxu0 0.0
    %1959 = vmatpush1.msra.mxu0 0.0
    %1960 = vmatprep.subr.mxu0 0.0
    %1961 = vmatpush1.msra.mxu0 0.0
    %1962 = vmatprep.subr.mxu0 0.0
    %1963 = vmatpush1.msra.mxu0 0.0
    %1964 = vmatprep.subr.mxu0 0.0
    %1965 = vmatpush1.msra.mxu0 0.0
    %1966 = vmatprep.subr.mxu0 0.0
    %1967 = vmatpush1.msra.mxu0 0.0
    %1968 = vmatprep.subr.mxu0 0.0
    %1969 = vmatpush1.msra.mxu0 0.0
    %1970 = vmatprep.subr.mxu0 0.0
    %1971 = vmatpush1.msra.mxu0 0.0
    %1972 = vmatprep.subr.mxu0 0.0
    %1973 = vmatpush1.msra.mxu0 0.0
    %1974 = vmatprep.subr.mxu0 0.0
    %1975 = vmatpush1.msra.mxu0 0.0
    %1976 = vmatprep.subr.mxu0 0.0
    %1977 = vmatpush1.msra.mxu0 0.0
    %1978 = vmatprep.subr.mxu0 0.0
    %1979 = vmatpush1.msra.mxu0 0.0
    %1980 = vmatprep.subr.mxu0 0.0
    %1981 = vmatpush1.msra.mxu0 0.0
    %1982 = vmatprep.mubr.f32.mxu0 0.0
    %1983 = vmatmul.mubr.f32.gmra.mrb[0].mxu0 %v1916
    %v1984 = vpop.f32.mrb[0].mxu0
    %v1985 = vadd.f32 0.0, %v1984
    %v1986 = vpop.f32.mrb[0].mxu0
    %1987 = vdwg.mxu0
    %v1988 = vadd.f32 %v1915, %v1985
    %v1989 = vxor.u32 %v1988, 2147483648
    %v1990 = vmul.f32 %v1989, 1.442695
    %v1991 = vpow.pop %v1990
    %v1992 = vadd.f32 %v1991, 1.0
    %v1993 = vrcp.pop %v1992
    %v1994 = vmul.f32 1.0, %v1993
    %v1995 = vtanh.pop %v1988
    %v1996 = vmul.f32 %v1994, %v1903
    %1998 = vrot.lane.b32.xlu0 %v1995, 64
    %v1999 = vpop.permute.xlu0 %1998
    %v2001 = vmul.f32 %v1994, %v1999
    %2003 = vrot.lane.b32.xlu0 %v2001, 32
    %v2004 = vpop.permute.xlu0 %2003
    %v2006 = vadd.f32 %v1996, %v2004
    %v2007 = vtanh.pop %v2006
    %2009 = vrot.lane.b32.xlu0 %v2007, 64
    %v2010 = vpop.permute.xlu0 %2009
    %v2012 = vmul.f32 %v1994, %v2010
    %2014 = vrot.lane.b32.xlu0 %v2012, 32
    %v2015 = vpop.permute.xlu0 %2014
    %2017 = vst.msk [vmem:[%s7 + $0x38] sm:$0xff] %vm205, %v2015
    %s2018 = scalar_lea.vmem [#allocation6], 8
    %2019 = vst.msk [vmem:[%s2018] sm:$0xff] %vm205, %v2015
    %2021 = vrot.lane.b32.xlu0 %v2006, 96
    %v2022 = vpop.permute.xlu0 %2021
    %s2024 = scalar_lea.vmem [#allocation7], 8
    %2025 = vst.msk [vmem:[%s2024] sm:$0xff] %vm205, %v2022
    // Predicated region
    $region34: #{tpu_custom_call.1} parent=1 // pred_check
      _
    $region35: #{tpu_custom_call.1} parent=1 // pred_check_branch
      %2027 = sbr.rel (0) target = $region37
    $region36: #{tpu_custom_call.1} parent=1 // pred_region
      _
    $region37: #{tpu_custom_call.1} parent=1 // pred_fallthru
      _
    // Predicated region
    $region38: #{tpu_custom_call.1} parent=1 // pred_check
      _
    $region39: #{tpu_custom_call.1} parent=1 // pred_check_branch
      %2029 = sbr.rel (0) target = $region41
    $region40: #{tpu_custom_call.1} parent=1 // pred_region
      %s2031 = ssub.s32 256, 256
      %2032 = vsyncadd [#allocation5], %s2031
      %s2033 = sshll.u32 [#allocation6], 4
      %s2034 = int_to_ptr.vmem [resolvable:$true] %s2033
      %2039 = dma.vmem_to_hbm [thread:$0]  %s2034, 256, %s8, [#allocation5], 128, 128, 8
    $region41: #{tpu_custom_call.1} parent=1 // pred_fallthru
      _
    // Predicated region
    $region42: #{tpu_custom_call.1} parent=1 // pred_check
      _
    $region43: #{tpu_custom_call.1} parent=1 // pred_check_branch
      %2041 = sbr.rel (0) target = $region45
    $region44: #{tpu_custom_call.1} parent=1 // pred_region
      %s2043 = ssub.s32 256, 256
      %2044 = vsyncadd [#allocation8], %s2043
      %s2045 = sshll.u32 [#allocation7], 4
      %s2046 = int_to_ptr.vmem [resolvable:$true] %s2045
      %2051 = dma.vmem_to_hbm [thread:$0]  %s2046, 256, %s9, [#allocation8], 128, 128, 8
    $region45: #{tpu_custom_call.1} parent=1 // pred_fallthru
      _
    // Predicated region
    $region46: #{tpu_custom_call.1} parent=1 // pred_check
      _
    $region47: #{tpu_custom_call.1} parent=1 // pred_check_branch
      %2053 = sbr.rel (0) target = $region49
    $region48: #{tpu_custom_call.1} parent=1 // pred_region
      _
    $region49: #{tpu_custom_call.1} parent=1 // pred_fallthru
      _
    // Predicated region
    $region50: #{tpu_custom_call.1} parent=1 // pred_check
      _
    $region51: #{tpu_custom_call.1} parent=1 // pred_check_branch
      %2055 = sbr.rel (0) target = $region53
    $region52: #{tpu_custom_call.1} parent=1 // pred_region
      %2056 = dma.done [#allocation5], 256
    $region53: #{tpu_custom_call.1} parent=1 // pred_fallthru
      _
    // Predicated region
    $region54: #{tpu_custom_call.1} parent=1 // pred_check
      _
    $region55: #{tpu_custom_call.1} parent=1 // pred_check_branch
      %2058 = sbr.rel (0) target = $region57
    $region56: #{tpu_custom_call.1} parent=1 // pred_region
      %2059 = dma.done [#allocation8], 256
    $region57: #{tpu_custom_call.1} parent=1 // pred_fallthru
      _
    %2060 = vsyncpa [#allocation4], 1
    %2061 = vsyncpa [#allocation5], 1
    %2062 = vsyncpa [#allocation8], 1

</llo_original>
